<compile_context>
chip_gen: v5e
topology: v5e:2x2
jax: 0.10.0
libtpu: 0.0.40
codegen_flags: <defaults>
</compile_context>

<pallas_src>
import jax
import jax.numpy as jnp
from jax.experimental import pallas as pl
from jax.experimental.pallas import tpu as pltpu

STATE_C, STATE_H, STATE_W = 3, 21, 21
STATE_FLAT = STATE_C * STATE_H * STATE_W   # 1323 (K dim, deliberately unpadded)
FC1_UNITS = 512
FC2_UNITS = 256
ACTION_PAD = 128                           # lane-dense output width
MAX_TB = 256                               # batch-tile cap


def _round_up(x, m):
    return ((x + m - 1) // m) * m


def _choose_batch_tile(B):
    """Balanced batch tiles: cap at MAX_TB, keep padding waste < 8 rows/tile,
    and give v7x's two TensorCores >= 2 parallel grid steps once B >= 16."""
    n_tiles = max(pl.cdiv(B, MAX_TB), 2 if B >= 16 else 1)
    return _round_up(pl.cdiv(B, n_tiles), 8)


def _actor_kernel(ma_ref, x_ref, w1_ref, b1_ref, w2_ref, b2_ref,
                  w3_ref, b3_ref, o_ref):
    """One batch tile of the 3-layer MLP. max_action comes in via SMEM."""
    ma = ma_ref[0]
    # fc1 + ReLU: bf16 x bf16 -> f32 accumulation on the MXU; bias added in f32.
    h1 = jnp.dot(x_ref[...], w1_ref[...],
                 preferred_element_type=jnp.float32) + b1_ref[...]
    h1 = jnp.maximum(h1, 0.0)
    # fc2 + ReLU
    h2 = jnp.dot(h1.astype(w2_ref.dtype), w2_ref[...],
                 preferred_element_type=jnp.float32) + b2_ref[...]
    h2 = jnp.maximum(h2, 0.0)
    # fc3 + tanh, scaled by max_action (padded output lanes sliced off outside)
    h3 = jnp.dot(h2.astype(w3_ref.dtype), w3_ref[...],
                 preferred_element_type=jnp.float32) + b3_ref[...]
    o_ref[...] = (ma * jnp.tanh(h3)).astype(o_ref.dtype)


def pack_params(params, weight_dtype=jnp.bfloat16):
    """Cast/pad logical params once (NOT per call).

    w1: [1323, 512] -> weight_dtype (K left unpadded; Mosaic masks the tail)
    w3: [256, A]    -> [256, 128] zero cols; b3: [1, A] -> [1, 128]
    Biases stay f32 (added after f32 accumulation).
    weight_dtype=jnp.float32 is available for bit-exactness checks.
    """
    w1, b1, w2, b2, w3, b3 = params
    a = w3.shape[1]
    w1p = w1.astype(weight_dtype)
    w2p = w2.astype(weight_dtype)
    w3p = jnp.pad(w3, ((0, 0), (0, ACTION_PAD - a))).astype(weight_dtype)
    b1p = b1.reshape(1, -1).astype(jnp.float32)
    b2p = b2.reshape(1, -1).astype(jnp.float32)
    b3p = jnp.pad(b3.reshape(1, -1), ((0, 0), (0, ACTION_PAD - a))).astype(jnp.float32)
    return (w1p, b1p, w2p, b2p, w3p, b3p)


def td3_actor_forward(state, packed_params, max_action, action_size):
    """state: [B, 3, 21, 21] float32 (NCHW). Returns [B, action_size] float32."""
    w1, b1, w2, b2, w3, b3 = packed_params
    B = state.shape[0]
    act_dtype = w1.dtype   # stream activations in the weight dtype (bf16 default)

    # Flatten (row-major == torch.nn.Flatten on NCHW) + cast, fused in one op.
    # No K padding pass: the kernel consumes the full 1323-wide K directly.
    x = state.reshape(B, STATE_FLAT).astype(act_dtype)

    TB = _choose_batch_tile(B)
    B_pad = _round_up(B, TB)
    if B_pad != B:
        x = jnp.pad(x, ((0, B_pad - B), (0, 0)))
    grid = (B_pad // TB,)

    flops = 2 * B_pad * (STATE_FLAT * FC1_UNITS + FC1_UNITS * FC2_UNITS
                         + FC2_UNITS * ACTION_PAD)
    bytes_accessed = int(
        x.size * x.dtype.itemsize
        + sum(int(p.size) * p.dtype.itemsize for p in packed_params)
        + B_pad * ACTION_PAD * 4)

    ma = jnp.asarray([max_action], dtype=jnp.float32)

    out = pl.pallas_call(
        _actor_kernel,
        out_shape=jax.ShapeDtypeStruct((B_pad, ACTION_PAD), jnp.float32),
        grid_spec=pltpu.PrefetchScalarGridSpec(
            num_scalar_prefetch=1,
            grid=grid,
            in_specs=[
                # activations: walk the batch (full-array K block, no padding)
                pl.BlockSpec((TB, STATE_FLAT), lambda i, ma: (i, 0)),
                # weights / biases: constant block index -> VMEM-resident
                pl.BlockSpec((STATE_FLAT, FC1_UNITS), lambda i, ma: (0, 0)),
                pl.BlockSpec((1, FC1_UNITS), lambda i, ma: (0, 0)),
                pl.BlockSpec((FC1_UNITS, FC2_UNITS), lambda i, ma: (0, 0)),
                pl.BlockSpec((1, FC2_UNITS), lambda i, ma: (0, 0)),
                pl.BlockSpec((FC2_UNITS, ACTION_PAD), lambda i, ma: (0, 0)),
                pl.BlockSpec((1, ACTION_PAD), lambda i, ma: (0, 0)),
            ],
            out_specs=pl.BlockSpec((TB, ACTION_PAD), lambda i, ma: (i, 0)),
        ),
        compiler_params=pltpu.CompilerParams(
            dimension_semantics=("parallel",),      # v7x: 2 TCs split the batch
            vmem_limit_bytes=32 * 1024 * 1024,      # safe on v5e/v6e/v7x
        ),
        cost_estimate=pl.CostEstimate(
            flops=flops,
            transcendentals=B_pad * ACTION_PAD,     # tanh
            bytes_accessed=bytes_accessed,
        ),
    )(ma, x, w1, b1, w2, b2, w3, b3)

    return out[:B, :action_size]


def init_params(key, action_size):
    """Deterministic synthetic init mirroring the module's reset_parameters.

    hidden_init uses weight.size()[0] (= out_features in torch layout), so
    lim = 1/sqrt(fc1_units) for fc1 and 1/sqrt(fc2_units) for fc2. Biases keep
    torch's default Linear init: U(-1/sqrt(fan_in), 1/sqrt(fan_in)).
    Returned shapes are the *logical* (unpadded, f32) ones; call pack_params().
    """
    k = jax.random.split(key, 6)

    def u(kk, shape, lim):
        return jax.random.uniform(kk, shape, jnp.float32, -lim, lim)

    lim1 = 1.0 / jnp.sqrt(float(FC1_UNITS))
    lim2 = 1.0 / jnp.sqrt(float(FC2_UNITS))

    # weights stored as [in, out] for the kernel (x @ W)
    w1 = u(k[0], (STATE_FLAT, FC1_UNITS), lim1)
    b1 = u(k[1], (1, FC1_UNITS), 1.0 / jnp.sqrt(float(STATE_FLAT)))
    w2 = u(k[2], (FC1_UNITS, FC2_UNITS), lim2)
    b2 = u(k[3], (1, FC2_UNITS), 1.0 / jnp.sqrt(float(FC1_UNITS)))
    w3 = u(k[4], (FC2_UNITS, action_size), 0.003)
    b3 = u(k[5], (1, action_size), 1.0 / jnp.sqrt(float(FC2_UNITS)))
    return (w1, b1, w2, b2, w3, b3)


def _reference(state, params, max_action):
    w1, b1, w2, b2, w3, b3 = params
    x = state.reshape(state.shape[0], -1)
    x = jnp.maximum(x @ w1 + b1, 0.0)
    x = jnp.maximum(x @ w2 + b2, 0.0)
    return max_action * jnp.tanh(x @ w3 + b3)


if __name__ == "__main__":
    key = jax.random.PRNGKey(0)
    k_state, k_params = jax.random.split(key)

    batch = 2
    action_size = 4
    max_action = 2.0

    state = jax.random.normal(k_state, (batch, STATE_C, STATE_H, STATE_W),
                              dtype=jnp.float32)
    params = init_params(k_params, action_size)
    ref = _reference(state, params, max_action)

    # Tight correctness check: f32-packed weights -> pure-f32 kernel path.
    packed_f32 = pack_params(params, weight_dtype=jnp.float32)
    out_f32 = jax.block_until_ready(
        td3_actor_forward(state, packed_f32, max_action, action_size))
    assert out_f32.shape == (batch, action_size)
    assert jnp.allclose(out_f32, ref, atol=5e-5, rtol=1e-4), \
        "f32 kernel mismatch vs reference"

    # Default (performance) path: bf16 weights + activations, f32 accumulation.
    packed = pack_params(params)   # bf16 by default; pack once, reuse every call
    out = jax.block_until_ready(
        td3_actor_forward(state, packed, max_action, action_size))
    assert out.shape == (batch, action_size)
    assert jnp.allclose(out, ref, atol=1.5e-2, rtol=2e-2), \
        "bf16 kernel mismatch vs f32 reference"

    print("KERNEL_OK")
</pallas_src>

<mosaic_0001>
module attributes {stable_mosaic.version = 11 : i64} {
  func.func @_actor_kernel(%arg0: i32, %arg1: memref<1xf32, #tpu.memory_space<smem>>, %arg2: memref<8x1323xf32, #tpu.memory_space<vmem>>, %arg3: memref<1323x512xf32, #tpu.memory_space<vmem>>, %arg4: memref<1x512xf32, #tpu.memory_space<vmem>>, %arg5: memref<512x256xf32, #tpu.memory_space<vmem>>, %arg6: memref<1x256xf32, #tpu.memory_space<vmem>>, %arg7: memref<256x128xf32, #tpu.memory_space<vmem>>, %arg8: memref<1x128xf32, #tpu.memory_space<vmem>>, %arg9: memref<8x128xf32, #tpu.memory_space<vmem>>) attributes {dimension_semantics = [#tpu.dimension_semantics<parallel>], iteration_bounds = array<i64: 1>, scalar_prefetch = 1 : i64, scratch_operands = 0 : i64, tpu.core_type = #tpu.core_type<tc>, window_params = [{transform_indices = @transform_0, window_bounds = array<i64: 8, 1323>}, {pipeline_mode = #tpu.pipeline_mode<synchronous>, transform_indices = @transform_1, window_bounds = array<i64: 1323, 512>}, {pipeline_mode = #tpu.pipeline_mode<synchronous>, transform_indices = @transform_2, window_bounds = array<i64: 1, 512>}, {pipeline_mode = #tpu.pipeline_mode<synchronous>, transform_indices = @transform_3, window_bounds = array<i64: 512, 256>}, {pipeline_mode = #tpu.pipeline_mode<synchronous>, transform_indices = @transform_4, window_bounds = array<i64: 1, 256>}, {pipeline_mode = #tpu.pipeline_mode<synchronous>, transform_indices = @transform_5, window_bounds = array<i64: 256, 128>}, {pipeline_mode = #tpu.pipeline_mode<synchronous>, transform_indices = @transform_6, window_bounds = array<i64: 1, 128>}, {transform_indices = @transform_7, window_bounds = array<i64: 8, 128>}]} {
    %c0 = arith.constant 0 : index
    %0 = memref.load %arg1[%c0] : memref<1xf32, #tpu.memory_space<smem>>
    %c0_0 = arith.constant 0 : index
    %c0_1 = arith.constant 0 : index
    %1 = vector.load %arg2[%c0_0, %c0_1] : memref<8x1323xf32, #tpu.memory_space<vmem>>, vector<8x1323xf32>
    %c0_2 = arith.constant 0 : index
    %c0_3 = arith.constant 0 : index
    %2 = vector.load %arg3[%c0_2, %c0_3] : memref<1323x512xf32, #tpu.memory_space<vmem>>, vector<1323x512xf32>
    %cst = arith.constant dense<0.000000e+00> : vector<8x512xf32>
    %3 = tpu.matmul %1, %2, %cst {dimension_numbers = #tpu.dot_dimension_numbers<[1], [0], [0], [1], [0, 0, 1, 1], [], []>} : vector<8x1323xf32>, vector<1323x512xf32>, vector<8x512xf32> -> vector<8x512xf32>
    %c0_4 = arith.constant 0 : index
    %c0_5 = arith.constant 0 : index
    %4 = vector.load %arg4[%c0_4, %c0_5] : memref<1x512xf32, #tpu.memory_space<vmem>>, vector<1x512xf32>
    %5 = vector.broadcast %4 : vector<1x512xf32> to vector<8x512xf32>
    %6 = arith.addf %3, %5 : vector<8x512xf32>
    %cst_6 = arith.constant 0.000000e+00 : f32
    %7 = vector.broadcast %cst_6 : f32 to vector<8x512xf32>
    %8 = arith.maximumf %6, %7 : vector<8x512xf32>
    %c0_7 = arith.constant 0 : index
    %c0_8 = arith.constant 0 : index
    %9 = vector.load %arg5[%c0_7, %c0_8] : memref<512x256xf32, #tpu.memory_space<vmem>>, vector<512x256xf32>
    %cst_9 = arith.constant dense<0.000000e+00> : vector<8x256xf32>
    %10 = tpu.matmul %8, %9, %cst_9 {dimension_numbers = #tpu.dot_dimension_numbers<[1], [0], [0], [1], [0, 0, 1, 1], [], []>} : vector<8x512xf32>, vector<512x256xf32>, vector<8x256xf32> -> vector<8x256xf32>
    %c0_10 = arith.constant 0 : index
    %c0_11 = arith.constant 0 : index
    %11 = vector.load %arg6[%c0_10, %c0_11] : memref<1x256xf32, #tpu.memory_space<vmem>>, vector<1x256xf32>
    %12 = vector.broadcast %11 : vector<1x256xf32> to vector<8x256xf32>
    %13 = arith.addf %10, %12 : vector<8x256xf32>
    %cst_12 = arith.constant 0.000000e+00 : f32
    %14 = vector.broadcast %cst_12 : f32 to vector<8x256xf32>
    %15 = arith.maximumf %13, %14 : vector<8x256xf32>
    %c0_13 = arith.constant 0 : index
    %c0_14 = arith.constant 0 : index
    %16 = vector.load %arg7[%c0_13, %c0_14] : memref<256x128xf32, #tpu.memory_space<vmem>>, vector<256x128xf32>
    %cst_15 = arith.constant dense<0.000000e+00> : vector<8x128xf32>
    %17 = tpu.matmul %15, %16, %cst_15 {dimension_numbers = #tpu.dot_dimension_numbers<[1], [0], [0], [1], [0, 0, 1, 1], [], []>} : vector<8x256xf32>, vector<256x128xf32>, vector<8x128xf32> -> vector<8x128xf32>
    %c0_16 = arith.constant 0 : index
    %c0_17 = arith.constant 0 : index
    %18 = vector.load %arg8[%c0_16, %c0_17] : memref<1x128xf32, #tpu.memory_space<vmem>>, vector<1x128xf32>
    %19 = vector.broadcast %18 : vector<1x128xf32> to vector<8x128xf32>
    %20 = arith.addf %17, %19 : vector<8x128xf32>
    %21 = math.tanh %20 : vector<8x128xf32>
    %22 = vector.broadcast %0 : f32 to vector<8x128xf32>
    %23 = arith.mulf %22, %21 : vector<8x128xf32>
    %c0_18 = arith.constant 0 : index
    %c0_19 = arith.constant 0 : index
    %24 = vector.load %arg9[%c0_18, %c0_19] : memref<8x128xf32, #tpu.memory_space<vmem>>, vector<8x128xf32>
    tpu.vector_store %arg9[%c0_18, %c0_19], %23 {strides = array<i32>} : memref<8x128xf32, #tpu.memory_space<vmem>>, vector<8x128xf32>,
    return
  }
  func.func @transform_0(%arg0: i32, %arg1: memref<1xf32, #tpu.memory_space<smem>>) -> (i32, i32) {
    %c0_i32 = arith.constant 0 : i32
    %c0_i32_0 = arith.constant 0 : i32
    return %arg0, %c0_i32 : i32, i32
  }
  func.func @transform_1(%arg0: i32, %arg1: memref<1xf32, #tpu.memory_space<smem>>) -> (i32, i32) {
    %c0_i32 = arith.constant 0 : i32
    %c0_i32_0 = arith.constant 0 : i32
    %c0_i32_1 = arith.constant 0 : i32
    return %c0_i32, %c0_i32_0 : i32, i32
  }
  func.func @transform_2(%arg0: i32, %arg1: memref<1xf32, #tpu.memory_space<smem>>) -> (i32, i32) {
    %c0_i32 = arith.constant 0 : i32
    %c0_i32_0 = arith.constant 0 : i32
    %c0_i32_1 = arith.constant 0 : i32
    return %c0_i32, %c0_i32_0 : i32, i32
  }
  func.func @transform_3(%arg0: i32, %arg1: memref<1xf32, #tpu.memory_space<smem>>) -> (i32, i32) {
    %c0_i32 = arith.constant 0 : i32
    %c0_i32_0 = arith.constant 0 : i32
    %c0_i32_1 = arith.constant 0 : i32
    return %c0_i32, %c0_i32_0 : i32, i32
  }
  func.func @transform_4(%arg0: i32, %arg1: memref<1xf32, #tpu.memory_space<smem>>) -> (i32, i32) {
    %c0_i32 = arith.constant 0 : i32
    %c0_i32_0 = arith.constant 0 : i32
    %c0_i32_1 = arith.constant 0 : i32
    return %c0_i32, %c0_i32_0 : i32, i32
  }
  func.func @transform_5(%arg0: i32, %arg1: memref<1xf32, #tpu.memory_space<smem>>) -> (i32, i32) {
    %c0_i32 = arith.constant 0 : i32
    %c0_i32_0 = arith.constant 0 : i32
    %c0_i32_1 = arith.constant 0 : i32
    return %c0_i32, %c0_i32_0 : i32, i32
  }
  func.func @transform_6(%arg0: i32, %arg1: memref<1xf32, #tpu.memory_space<smem>>) -> (i32, i32) {
    %c0_i32 = arith.constant 0 : i32
    %c0_i32_0 = arith.constant 0 : i32
    %c0_i32_1 = arith.constant 0 : i32
    return %c0_i32, %c0_i32_0 : i32, i32
  }
  func.func @transform_7(%arg0: i32, %arg1: memref<1xf32, #tpu.memory_space<smem>>) -> (i32, i32) {
    %c0_i32 = arith.constant 0 : i32
    %c0_i32_0 = arith.constant 0 : i32
    return %arg0, %c0_i32 : i32, i32
  }
}

</mosaic_0001>

<llo_original>
// kernel: tpu_custom_call.1
$region0: #{tpu_custom_call.1}
  #allocation0 [shape = 'u32[]', space=smem, size = 0x4, offset = 0x4, fixed_abs, tag = 'smem constant byte address 0x4 - core index']
  #allocation1 [shape = 'u32[72,128]{1,0:T(1,128)}', space=vmem, size = 0x9000, scoped, tag = 'internal scratch']
  #allocation2 [shape = 's32[1]{0}', space=sflag, size = 0x4, scoped, tag = 'scoped memory for tpu_custom_call.1']
  #allocation3 [shape = 'f32[1]{0:T(128)S(6)}', space=smem, size = 0x200, scoped, tag = 'prefetched SMEM operand 0']
  %s0 = inlined_call_operand.<no memory space> [shape: f32[1], index: 0, kind: input, shape index: {}]
  %s1 = inlined_call_operand.hbm [shape: f32[8,1323], index: 1, kind: input, shape index: {}]
  %s2 = inlined_call_operand.hbm [shape: f32[1323,512], index: 2, kind: input, shape index: {}]
  %s3 = inlined_call_operand.hbm [shape: f32[1,512], index: 3, kind: input, shape index: {}]
  %s4 = inlined_call_operand.hbm [shape: f32[512,256], index: 4, kind: input, shape index: {}]
  %s5 = inlined_call_operand.hbm [shape: f32[1,256], index: 5, kind: input, shape index: {}]
  %s6 = inlined_call_operand.hbm [shape: f32[256,128], index: 6, kind: input, shape index: {}]
  %s7 = inlined_call_operand.hbm [shape: f32[1,128], index: 7, kind: input, shape index: {}]
  %s8 = inlined_call_operand.hbm [shape: f32[8,128], index: 8, kind: output, shape index: {}]
  %s9 = sld [smem:[#allocation0]]
  $region66: #{tpu_custom_call.1} parent=0
    _
  %s11 = ssub.s32 1, %s9
  %s12 = scalar_select 0, %s11, %s9
  %13 = sst [smem:[#allocation3]] %s0
  $region1: #{tpu_custom_call.1} parent=0
    #allocation4 [shape = 'u8[45056]{0}', space=vmem, size = 0xb000, scoped, tag = 'input window, operand 1, single buffered']
    #allocation5 [shape = 's32[1]{0}', space=sflag, size = 0x4, scoped, tag = 'scoped memory for tpu_custom_call.1']
    #allocation6 [shape = 's32[1]{0}', space=sflag, size = 0x4, scoped, tag = 'scoped memory for tpu_custom_call.1']
    #allocation7 [shape = 'u8[2719744]{0}', space=vmem, size = 0x298000, scoped, tag = 'input window, operand 2, single buffered']
    #allocation8 [shape = 's32[1]{0}', space=sflag, size = 0x4, scoped, tag = 'scoped memory for tpu_custom_call.1']
    #allocation9 [shape = 'u8[2048]{0}', space=vmem, size = 0x800, scoped, tag = 'input window, operand 3, single buffered']
    #allocation10 [shape = 'u8[524288]{0}', space=vmem, size = 0x80000, scoped, tag = 'input window, operand 4, single buffered']
    #allocation11 [shape = 's32[1]{0}', space=sflag, size = 0x4, scoped, tag = 'scoped memory for tpu_custom_call.1']
    #allocation12 [shape = 'u8[1024]{0}', space=vmem, size = 0x400, scoped, tag = 'input window, operand 5, single buffered']
    #allocation13 [shape = 'u8[131072]{0}', space=vmem, size = 0x20000, scoped, tag = 'input window, operand 6, single buffered']
    #allocation14 [shape = 's32[1]{0}', space=sflag, size = 0x4, scoped, tag = 'scoped memory for tpu_custom_call.1']
    #allocation15 [shape = 'u8[512]{0}', space=vmem, size = 0x400, scoped, tag = 'input window, operand 7, single buffered']
    #allocation16 [shape = 'u8[4096]{0}', space=vmem, size = 0x1000, scoped, tag = 'output window, operand 0, single buffered']
    %14 = vsyncpa [#allocation5], 0
    %15 = vsyncpa [#allocation8], 0
    %16 = vsyncpa [#allocation11], 0
    %17 = vsyncpa [#allocation14], 0
    %18 = vsyncpa [#allocation6], 0
    // Predicated region
    $region2: #{tpu_custom_call.1} parent=1 // pred_check
      _
    $region3: #{tpu_custom_call.1} parent=1 // pred_check_branch
      %20 = sbr.rel (0) target = $region5
    $region4: #{tpu_custom_call.1} parent=1 // pred_region
      %22 = vsyncadd [#allocation5], 0
      %s24 = sshll.u32 %s1, 4
      %s25 = int_to_ptr.hbm [resolvable:$true] %s24
      %s26 = sshll.u32 [#allocation4], 4
      %s27 = int_to_ptr.vmem [resolvable:$true] %s26
      %29 = dma.hbm_to_vmem [thread:$0]  %s25, 1408, %s27, [#allocation5]
    $region5: #{tpu_custom_call.1} parent=1 // pred_fallthru
      _
    // Predicated region
    $region6: #{tpu_custom_call.1} parent=1 // pred_check
      _
    $region7: #{tpu_custom_call.1} parent=1 // pred_check_branch
      %31 = sbr.rel (0) target = $region9
    $region8: #{tpu_custom_call.1} parent=1 // pred_region
      %33 = vsyncadd [#allocation8], 0
      %s34 = sshll.u32 %s2, 4
      %s35 = int_to_ptr.hbm [resolvable:$true] %s34
      %s36 = sshll.u32 [#allocation7], 4
      %s37 = int_to_ptr.vmem [resolvable:$true] %s36
      %42 = dma.hbm_to_vmem [thread:$0]  %s35, 84992, %s37, [#allocation8], 512, 512, 32
    $region9: #{tpu_custom_call.1} parent=1 // pred_fallthru
      _
    // Predicated region
    $region10: #{tpu_custom_call.1} parent=1 // pred_check
      _
    $region11: #{tpu_custom_call.1} parent=1 // pred_check_branch
      %44 = sbr.rel (0) target = $region13
    $region12: #{tpu_custom_call.1} parent=1 // pred_region
      %46 = vsyncadd [#allocation8], 0
      %s48 = sshll.u32 %s3, 4
      %s49 = int_to_ptr.hbm [resolvable:$true] %s48
      %s50 = sshll.u32 [#allocation9], 4
      %s51 = int_to_ptr.vmem [resolvable:$true] %s50
      %53 = dma.hbm_to_vmem [thread:$0]  %s49, 64, %s51, [#allocation8]
    $region13: #{tpu_custom_call.1} parent=1 // pred_fallthru
      _
    // Predicated region
    $region14: #{tpu_custom_call.1} parent=1 // pred_check
      _
    $region15: #{tpu_custom_call.1} parent=1 // pred_check_branch
      %55 = sbr.rel (0) target = $region17
    $region16: #{tpu_custom_call.1} parent=1 // pred_region
      %57 = vsyncadd [#allocation11], 0
      %s58 = sshll.u32 %s4, 4
      %s59 = int_to_ptr.hbm [resolvable:$true] %s58
      %s60 = sshll.u32 [#allocation10], 4
      %s61 = int_to_ptr.vmem [resolvable:$true] %s60
      %66 = dma.hbm_to_vmem [thread:$0]  %s59, 16384, %s61, [#allocation11], 256, 256, 16
    $region17: #{tpu_custom_call.1} parent=1 // pred_fallthru
      _
    // Predicated region
    $region18: #{tpu_custom_call.1} parent=1 // pred_check
      _
    $region19: #{tpu_custom_call.1} parent=1 // pred_check_branch
      %68 = sbr.rel (0) target = $region21
    $region20: #{tpu_custom_call.1} parent=1 // pred_region
      %70 = vsyncadd [#allocation11], 0
      %s72 = sshll.u32 %s5, 4
      %s73 = int_to_ptr.hbm [resolvable:$true] %s72
      %s74 = sshll.u32 [#allocation12], 4
      %s75 = int_to_ptr.vmem [resolvable:$true] %s74
      %77 = dma.hbm_to_vmem [thread:$0]  %s73, 32, %s75, [#allocation11]
    $region21: #{tpu_custom_call.1} parent=1 // pred_fallthru
      _
    // Predicated region
    $region22: #{tpu_custom_call.1} parent=1 // pred_check
      _
    $region23: #{tpu_custom_call.1} parent=1 // pred_check_branch
      %79 = sbr.rel (0) target = $region25
    $region24: #{tpu_custom_call.1} parent=1 // pred_region
      %81 = vsyncadd [#allocation14], 0
      %s82 = sshll.u32 %s6, 4
      %s83 = int_to_ptr.hbm [resolvable:$true] %s82
      %s84 = sshll.u32 [#allocation13], 4
      %s85 = int_to_ptr.vmem [resolvable:$true] %s84
      %90 = dma.hbm_to_vmem [thread:$0]  %s83, 4096, %s85, [#allocation14], 128, 128, 8
    $region25: #{tpu_custom_call.1} parent=1 // pred_fallthru
      _
    // Predicated region
    $region26: #{tpu_custom_call.1} parent=1 // pred_check
      _
    $region27: #{tpu_custom_call.1} parent=1 // pred_check_branch
      %92 = sbr.rel (0) target = $region29
    $region28: #{tpu_custom_call.1} parent=1 // pred_region
      %94 = vsyncadd [#allocation14], 0
      %s96 = sshll.u32 %s7, 4
      %s97 = int_to_ptr.hbm [resolvable:$true] %s96
      %s98 = sshll.u32 [#allocation15], 4
      %s99 = int_to_ptr.vmem [resolvable:$true] %s98
      %101 = dma.hbm_to_vmem [thread:$0]  %s97, 16, %s99, [#allocation14]
    $region29: #{tpu_custom_call.1} parent=1 // pred_fallthru
      _
    // Predicated region
    $region30: #{tpu_custom_call.1} parent=1 // pred_check
      _
    $region31: #{tpu_custom_call.1} parent=1 // pred_check_branch
      %103 = sbr.rel (0) target = $region33
    $region32: #{tpu_custom_call.1} parent=1 // pred_region
      %105 = dma.done [#allocation5], 1408
    $region33: #{tpu_custom_call.1} parent=1 // pred_fallthru
      _
    // Predicated region
    $region34: #{tpu_custom_call.1} parent=1 // pred_check
      _
    $region35: #{tpu_custom_call.1} parent=1 // pred_check_branch
      %107 = sbr.rel (0) target = $region37
    $region36: #{tpu_custom_call.1} parent=1 // pred_region
      %109 = dma.done [#allocation8], 84992
    $region37: #{tpu_custom_call.1} parent=1 // pred_fallthru
      _
    // Predicated region
    $region38: #{tpu_custom_call.1} parent=1 // pred_check
      _
    $region39: #{tpu_custom_call.1} parent=1 // pred_check_branch
      %111 = sbr.rel (0) target = $region41
    $region40: #{tpu_custom_call.1} parent=1 // pred_region
      %113 = dma.done [#allocation8], 64
    $region41: #{tpu_custom_call.1} parent=1 // pred_fallthru
      _
    // Predicated region
    $region42: #{tpu_custom_call.1} parent=1 // pred_check
      _
    $region43: #{tpu_custom_call.1} parent=1 // pred_check_branch
      %115 = sbr.rel (0) target = $region45
    $region44: #{tpu_custom_call.1} parent=1 // pred_region
      %117 = dma.done [#allocation11], 16384
    $region45: #{tpu_custom_call.1} parent=1 // pred_fallthru
      _
    // Predicated region
    $region46: #{tpu_custom_call.1} parent=1 // pred_check
      _
    $region47: #{tpu_custom_call.1} parent=1 // pred_check_branch
      %119 = sbr.rel (0) target = $region49
    $region48: #{tpu_custom_call.1} parent=1 // pred_region
      %121 = dma.done [#allocation11], 32
    $region49: #{tpu_custom_call.1} parent=1 // pred_fallthru
      _
    // Predicated region
    $region50: #{tpu_custom_call.1} parent=1 // pred_check
      _
    $region51: #{tpu_custom_call.1} parent=1 // pred_check_branch
      %123 = sbr.rel (0) target = $region53
    $region52: #{tpu_custom_call.1} parent=1 // pred_region
      %125 = dma.done [#allocation14], 4096
    $region53: #{tpu_custom_call.1} parent=1 // pred_fallthru
      _
    // Predicated region
    $region54: #{tpu_custom_call.1} parent=1 // pred_check
      _
    $region55: #{tpu_custom_call.1} parent=1 // pred_check_branch
      %127 = sbr.rel (0) target = $region57
    $region56: #{tpu_custom_call.1} parent=1 // pred_region
      %129 = dma.done [#allocation14], 16
    $region57: #{tpu_custom_call.1} parent=1 // pred_fallthru
      _
    %s130 = sld [smem:[#allocation3]]
    %v131 = vld [vmem:[#allocation4] sm:$0xff]
    %v132 = vld [vmem:[#allocation4 + $0x8] sm:$0xff]
    %v133 = vld [vmem:[#allocation4 + $0x10] sm:$0xff]
    %v134 = vld [vmem:[#allocation4 + $0x18] sm:$0xff]
    %v135 = vld [vmem:[#allocation4 + $0x20] sm:$0xff]
    %v136 = vld [vmem:[#allocation4 + $0x28] sm:$0xff]
    %v137 = vld [vmem:[#allocation4 + $0x30] sm:$0xff]
    %v138 = vld [vmem:[#allocation4 + $0x38] sm:$0xff]
    %v139 = vld [vmem:[#allocation4 + $0x40] sm:$0xff]
    %v140 = vld [vmem:[#allocation4 + $0x48] sm:$0xff]
    %v141 = vld [vmem:[#allocation4 + $0x50] sm:$0xff]
    %v142 = vld [vmem:[#allocation7] sm:$0xff]
    %v143 = vld [vmem:[#allocation7 + $0x8] sm:$0xff]
    %v144 = vld [vmem:[#allocation7 + $0x10] sm:$0xff]
    %v145 = vld [vmem:[#allocation7 + $0x18] sm:$0xff]
    %v146 = vld [vmem:[#allocation7 + $0x20] sm:$0xff]
    %v147 = vld [vmem:[#allocation7 + $0x28] sm:$0xff]
    %v148 = vld [vmem:[#allocation7 + $0x30] sm:$0xff]
    %v149 = vld [vmem:[#allocation7 + $0x38] sm:$0xff]
    %v150 = vld [vmem:[#allocation7 + $0x40] sm:$0xff]
    %v151 = vld [vmem:[#allocation7 + $0x48] sm:$0xff]
    %v152 = vld [vmem:[#allocation7 + $0x50] sm:$0xff]
    %v153 = vld [vmem:[#allocation7 + $0x58] sm:$0xff]
    %v154 = vld [vmem:[#allocation7 + $0x60] sm:$0xff]
    %v155 = vld [vmem:[#allocation7 + $0x68] sm:$0xff]
    %v156 = vld [vmem:[#allocation7 + $0x70] sm:$0xff]
    %v157 = vld [vmem:[#allocation7 + $0x78] sm:$0xff]
    %v158 = vld [vmem:[#allocation7 + $0x80] sm:$0xff]
    %v159 = vld [vmem:[#allocation7 + $0x88] sm:$0xff]
    %v160 = vld [vmem:[#allocation7 + $0x90] sm:$0xff]
    %v161 = vld [vmem:[#allocation7 + $0x98] sm:$0xff]
    %v162 = vld [vmem:[#allocation7 + $0xa0] sm:$0xff]
    %v163 = vld [vmem:[#allocation7 + $0xa8] sm:$0xff]
    %v164 = vld [vmem:[#allocation7 + $0xb0] sm:$0xff]
    %v165 = vld [vmem:[#allocation7 + $0xb8] sm:$0xff]
    %v166 = vld [vmem:[#allocation7 + $0xc0] sm:$0xff]
    %v167 = vld [vmem:[#allocation7 + $0xc8] sm:$0xff]
    %v168 = vld [vmem:[#allocation7 + $0xd0] sm:$0xff]
    %v169 = vld [vmem:[#allocation7 + $0xd8] sm:$0xff]
    %v170 = vld [vmem:[#allocation7 + $0xe0] sm:$0xff]
    %v171 = vld [vmem:[#allocation7 + $0xe8] sm:$0xff]
    %v172 = vld [vmem:[#allocation7 + $0xf0] sm:$0xff]
    %v173 = vld [vmem:[#allocation7 + $0xf8] sm:$0xff]
    %v174 = vld [vmem:[#allocation7 + $0x100] sm:$0xff]
    %v175 = vld [vmem:[#allocation7 + $0x108] sm:$0xff]
    %v176 = vld [vmem:[#allocation7 + $0x110] sm:$0xff]
    %v177 = vld [vmem:[#allocation7 + $0x118] sm:$0xff]
    %v178 = vld [vmem:[#allocation7 + $0x120] sm:$0xff]
    %v179 = vld [vmem:[#allocation7 + $0x128] sm:$0xff]
    %v180 = vld [vmem:[#allocation7 + $0x130] sm:$0xff]
    %v181 = vld [vmem:[#allocation7 + $0x138] sm:$0xff]
    %v182 = vld [vmem:[#allocation7 + $0x140] sm:$0xff]
    %v183 = vld [vmem:[#allocation7 + $0x148] sm:$0xff]
    %v184 = vld [vmem:[#allocation7 + $0x150] sm:$0xff]
    %v185 = vld [vmem:[#allocation7 + $0x158] sm:$0xff]
    %v186 = vld [vmem:[#allocation7 + $0x160] sm:$0xff]
    %v187 = vld [vmem:[#allocation7 + $0x168] sm:$0xff]
    %v188 = vld [vmem:[#allocation7 + $0x170] sm:$0xff]
    %v189 = vld [vmem:[#allocation7 + $0x178] sm:$0xff]
    %v190 = vld [vmem:[#allocation7 + $0x180] sm:$0xff]
    %v191 = vld [vmem:[#allocation7 + $0x188] sm:$0xff]
    %v192 = vld [vmem:[#allocation7 + $0x190] sm:$0xff]
    %v193 = vld [vmem:[#allocation7 + $0x198] sm:$0xff]
    %v194 = vld [vmem:[#allocation7 + $0x1a0] sm:$0xff]
    %v195 = vld [vmem:[#allocation7 + $0x1a8] sm:$0xff]
    %v196 = vld [vmem:[#allocation7 + $0x1b0] sm:$0xff]
    %v197 = vld [vmem:[#allocation7 + $0x1b8] sm:$0xff]
    %v198 = vld [vmem:[#allocation7 + $0x1c0] sm:$0xff]
    %v199 = vld [vmem:[#allocation7 + $0x1c8] sm:$0xff]
    %v200 = vld [vmem:[#allocation7 + $0x1d0] sm:$0xff]
    %v201 = vld [vmem:[#allocation7 + $0x1d8] sm:$0xff]
    %v202 = vld [vmem:[#allocation7 + $0x1e0] sm:$0xff]
    %v203 = vld [vmem:[#allocation7 + $0x1e8] sm:$0xff]
    %v204 = vld [vmem:[#allocation7 + $0x1f0] sm:$0xff]
    %v205 = vld [vmem:[#allocation7 + $0x1f8] sm:$0xff]
    %v206 = vld [vmem:[#allocation7 + $0x200] sm:$0xff]
    %v207 = vld [vmem:[#allocation7 + $0x208] sm:$0xff]
    %v208 = vld [vmem:[#allocation7 + $0x210] sm:$0xff]
    %v209 = vld [vmem:[#allocation7 + $0x218] sm:$0xff]
    %v210 = vld [vmem:[#allocation7 + $0x220] sm:$0xff]
    %v211 = vld [vmem:[#allocation7 + $0x228] sm:$0xff]
    %v212 = vld [vmem:[#allocation7 + $0x230] sm:$0xff]
    %v213 = vld [vmem:[#allocation7 + $0x238] sm:$0xff]
    %v214 = vld [vmem:[#allocation7 + $0x240] sm:$0xff]
    %v215 = vld [vmem:[#allocation7 + $0x248] sm:$0xff]
    %v216 = vld [vmem:[#allocation7 + $0x250] sm:$0xff]
    %v217 = vld [vmem:[#allocation7 + $0x258] sm:$0xff]
    %v218 = vld [vmem:[#allocation7 + $0x260] sm:$0xff]
    %v219 = vld [vmem:[#allocation7 + $0x268] sm:$0xff]
    %v220 = vld [vmem:[#allocation7 + $0x270] sm:$0xff]
    %v221 = vld [vmem:[#allocation7 + $0x278] sm:$0xff]
    %v222 = vld [vmem:[#allocation7 + $0x280] sm:$0xff]
    %v223 = vld [vmem:[#allocation7 + $0x288] sm:$0xff]
    %v224 = vld [vmem:[#allocation7 + $0x290] sm:$0xff]
    %v225 = vld [vmem:[#allocation7 + $0x298] sm:$0xff]
    %v226 = vld [vmem:[#allocation7 + $0x2a0] sm:$0xff]
    %v227 = vld [vmem:[#allocation7 + $0x2a8] sm:$0xff]
    %v228 = vld [vmem:[#allocation7 + $0x2b0] sm:$0xff]
    %v229 = vld [vmem:[#allocation7 + $0x2b8] sm:$0xff]
    %v230 = vld [vmem:[#allocation7 + $0x2c0] sm:$0xff]
    %v231 = vld [vmem:[#allocation7 + $0x2c8] sm:$0xff]
    %v232 = vld [vmem:[#allocation7 + $0x2d0] sm:$0xff]
    %v233 = vld [vmem:[#allocation7 + $0x2d8] sm:$0xff]
    %v234 = vld [vmem:[#allocation7 + $0x2e0] sm:$0xff]
    %v235 = vld [vmem:[#allocation7 + $0x2e8] sm:$0xff]
    %v236 = vld [vmem:[#allocation7 + $0x2f0] sm:$0xff]
    %v237 = vld [vmem:[#allocation7 + $0x2f8] sm:$0xff]
    %v238 = vld [vmem:[#allocation7 + $0x300] sm:$0xff]
    %v239 = vld [vmem:[#allocation7 + $0x308] sm:$0xff]
    %v240 = vld [vmem:[#allocation7 + $0x310] sm:$0xff]
    %v241 = vld [vmem:[#allocation7 + $0x318] sm:$0xff]
    %v242 = vld [vmem:[#allocation7 + $0x320] sm:$0xff]
    %v243 = vld [vmem:[#allocation7 + $0x328] sm:$0xff]
    %v244 = vld [vmem:[#allocation7 + $0x330] sm:$0xff]
    %v245 = vld [vmem:[#allocation7 + $0x338] sm:$0xff]
    %v246 = vld [vmem:[#allocation7 + $0x340] sm:$0xff]
    %v247 = vld [vmem:[#allocation7 + $0x348] sm:$0xff]
    %v248 = vld [vmem:[#allocation7 + $0x350] sm:$0xff]
    %v249 = vld [vmem:[#allocation7 + $0x358] sm:$0xff]
    %v250 = vld [vmem:[#allocation7 + $0x360] sm:$0xff]
    %v251 = vld [vmem:[#allocation7 + $0x368] sm:$0xff]
    %v252 = vld [vmem:[#allocation7 + $0x370] sm:$0xff]
    %v253 = vld [vmem:[#allocation7 + $0x378] sm:$0xff]
    %v254 = vld [vmem:[#allocation7 + $0x380] sm:$0xff]
    %v255 = vld [vmem:[#allocation7 + $0x388] sm:$0xff]
    %v256 = vld [vmem:[#allocation7 + $0x390] sm:$0xff]
    %v257 = vld [vmem:[#allocation7 + $0x398] sm:$0xff]
    %v258 = vld [vmem:[#allocation7 + $0x3a0] sm:$0xff]
    %v259 = vld [vmem:[#allocation7 + $0x3a8] sm:$0xff]
    %v260 = vld [vmem:[#allocation7 + $0x3b0] sm:$0xff]
    %v261 = vld [vmem:[#allocation7 + $0x3b8] sm:$0xff]
    %v262 = vld [vmem:[#allocation7 + $0x3c0] sm:$0xff]
    %v263 = vld [vmem:[#allocation7 + $0x3c8] sm:$0xff]
    %v264 = vld [vmem:[#allocation7 + $0x3d0] sm:$0xff]
    %v265 = vld [vmem:[#allocation7 + $0x3d8] sm:$0xff]
    %v266 = vld [vmem:[#allocation7 + $0x3e0] sm:$0xff]
    %v267 = vld [vmem:[#allocation7 + $0x3e8] sm:$0xff]
    %v268 = vld [vmem:[#allocation7 + $0x3f0] sm:$0xff]
    %v269 = vld [vmem:[#allocation7 + $0x3f8] sm:$0xff]
    %v270 = vld [vmem:[#allocation7 + $0x400] sm:$0xff]
    %v271 = vld [vmem:[#allocation7 + $0x408] sm:$0xff]
    %v272 = vld [vmem:[#allocation7 + $0x410] sm:$0xff]
    %v273 = vld [vmem:[#allocation7 + $0x418] sm:$0xff]
    %v274 = vld [vmem:[#allocation7 + $0x420] sm:$0xff]
    %v275 = vld [vmem:[#allocation7 + $0x428] sm:$0xff]
    %v276 = vld [vmem:[#allocation7 + $0x430] sm:$0xff]
    %v277 = vld [vmem:[#allocation7 + $0x438] sm:$0xff]
    %v278 = vld [vmem:[#allocation7 + $0x440] sm:$0xff]
    %v279 = vld [vmem:[#allocation7 + $0x448] sm:$0xff]
    %v280 = vld [vmem:[#allocation7 + $0x450] sm:$0xff]
    %v281 = vld [vmem:[#allocation7 + $0x458] sm:$0xff]
    %v282 = vld [vmem:[#allocation7 + $0x460] sm:$0xff]
    %v283 = vld [vmem:[#allocation7 + $0x468] sm:$0xff]
    %v284 = vld [vmem:[#allocation7 + $0x470] sm:$0xff]
    %v285 = vld [vmem:[#allocation7 + $0x478] sm:$0xff]
    %v286 = vld [vmem:[#allocation7 + $0x480] sm:$0xff]
    %v287 = vld [vmem:[#allocation7 + $0x488] sm:$0xff]
    %v288 = vld [vmem:[#allocation7 + $0x490] sm:$0xff]
    %v289 = vld [vmem:[#allocation7 + $0x498] sm:$0xff]
    %v290 = vld [vmem:[#allocation7 + $0x4a0] sm:$0xff]
    %v291 = vld [vmem:[#allocation7 + $0x4a8] sm:$0xff]
    %v292 = vld [vmem:[#allocation7 + $0x4b0] sm:$0xff]
    %v293 = vld [vmem:[#allocation7 + $0x4b8] sm:$0xff]
    %v294 = vld [vmem:[#allocation7 + $0x4c0] sm:$0xff]
    %v295 = vld [vmem:[#allocation7 + $0x4c8] sm:$0xff]
    %v296 = vld [vmem:[#allocation7 + $0x4d0] sm:$0xff]
    %v297 = vld [vmem:[#allocation7 + $0x4d8] sm:$0xff]
    %v298 = vld [vmem:[#allocation7 + $0x4e0] sm:$0xff]
    %v299 = vld [vmem:[#allocation7 + $0x4e8] sm:$0xff]
    %v300 = vld [vmem:[#allocation7 + $0x4f0] sm:$0xff]
    %v301 = vld [vmem:[#allocation7 + $0x4f8] sm:$0xff]
    %v302 = vld [vmem:[#allocation7 + $0x500] sm:$0xff]
    %v303 = vld [vmem:[#allocation7 + $0x508] sm:$0xff]
    %v304 = vld [vmem:[#allocation7 + $0x510] sm:$0xff]
    %v305 = vld [vmem:[#allocation7 + $0x518] sm:$0xff]
    %v306 = vld [vmem:[#allocation7 + $0x520] sm:$0xff]
    %v307 = vld [vmem:[#allocation7 + $0x528] sm:$0xff]
    %v308 = vld [vmem:[#allocation7 + $0x530] sm:$0xff]
    %v309 = vld [vmem:[#allocation7 + $0x538] sm:$0xff]
    %v310 = vld [vmem:[#allocation7 + $0x540] sm:$0xff]
    %v311 = vld [vmem:[#allocation7 + $0x548] sm:$0xff]
    %v312 = vld [vmem:[#allocation7 + $0x550] sm:$0xff]
    %v313 = vld [vmem:[#allocation7 + $0x558] sm:$0xff]
    %v314 = vld [vmem:[#allocation7 + $0x560] sm:$0xff]
    %v315 = vld [vmem:[#allocation7 + $0x568] sm:$0xff]
    %v316 = vld [vmem:[#allocation7 + $0x570] sm:$0xff]
    %v317 = vld [vmem:[#allocation7 + $0x578] sm:$0xff]
    %v318 = vld [vmem:[#allocation7 + $0x580] sm:$0xff]
    %v319 = vld [vmem:[#allocation7 + $0x588] sm:$0xff]
    %v320 = vld [vmem:[#allocation7 + $0x590] sm:$0xff]
    %v321 = vld [vmem:[#allocation7 + $0x598] sm:$0xff]
    %v322 = vld [vmem:[#allocation7 + $0x5a0] sm:$0xff]
    %v323 = vld [vmem:[#allocation7 + $0x5a8] sm:$0xff]
    %v324 = vld [vmem:[#allocation7 + $0x5b0] sm:$0xff]
    %v325 = vld [vmem:[#allocation7 + $0x5b8] sm:$0xff]
    %v326 = vld [vmem:[#allocation7 + $0x5c0] sm:$0xff]
    %v327 = vld [vmem:[#allocation7 + $0x5c8] sm:$0xff]
    %v328 = vld [vmem:[#allocation7 + $0x5d0] sm:$0xff]
    %v329 = vld [vmem:[#allocation7 + $0x5d8] sm:$0xff]
    %v330 = vld [vmem:[#allocation7 + $0x5e0] sm:$0xff]
    %v331 = vld [vmem:[#allocation7 + $0x5e8] sm:$0xff]
    %v332 = vld [vmem:[#allocation7 + $0x5f0] sm:$0xff]
    %v333 = vld [vmem:[#allocation7 + $0x5f8] sm:$0xff]
    %v334 = vld [vmem:[#allocation7 + $0x600] sm:$0xff]
    %v335 = vld [vmem:[#allocation7 + $0x608] sm:$0xff]
    %v336 = vld [vmem:[#allocation7 + $0x610] sm:$0xff]
    %v337 = vld [vmem:[#allocation7 + $0x618] sm:$0xff]
    %v338 = vld [vmem:[#allocation7 + $0x620] sm:$0xff]
    %v339 = vld [vmem:[#allocation7 + $0x628] sm:$0xff]
    %v340 = vld [vmem:[#allocation7 + $0x630] sm:$0xff]
    %v341 = vld [vmem:[#allocation7 + $0x638] sm:$0xff]
    %v342 = vld [vmem:[#allocation7 + $0x640] sm:$0xff]
    %v343 = vld [vmem:[#allocation7 + $0x648] sm:$0xff]
    %v344 = vld [vmem:[#allocation7 + $0x650] sm:$0xff]
    %v345 = vld [vmem:[#allocation7 + $0x658] sm:$0xff]
    %v346 = vld [vmem:[#allocation7 + $0x660] sm:$0xff]
    %v347 = vld [vmem:[#allocation7 + $0x668] sm:$0xff]
    %v348 = vld [vmem:[#allocation7 + $0x670] sm:$0xff]
    %v349 = vld [vmem:[#allocation7 + $0x678] sm:$0xff]
    %v350 = vld [vmem:[#allocation7 + $0x680] sm:$0xff]
    %v351 = vld [vmem:[#allocation7 + $0x688] sm:$0xff]
    %v352 = vld [vmem:[#allocation7 + $0x690] sm:$0xff]
    %v353 = vld [vmem:[#allocation7 + $0x698] sm:$0xff]
    %v354 = vld [vmem:[#allocation7 + $0x6a0] sm:$0xff]
    %v355 = vld [vmem:[#allocation7 + $0x6a8] sm:$0xff]
    %v356 = vld [vmem:[#allocation7 + $0x6b0] sm:$0xff]
    %v357 = vld [vmem:[#allocation7 + $0x6b8] sm:$0xff]
    %v358 = vld [vmem:[#allocation7 + $0x6c0] sm:$0xff]
    %v359 = vld [vmem:[#allocation7 + $0x6c8] sm:$0xff]
    %v360 = vld [vmem:[#allocation7 + $0x6d0] sm:$0xff]
    %v361 = vld [vmem:[#allocation7 + $0x6d8] sm:$0xff]
    %v362 = vld [vmem:[#allocation7 + $0x6e0] sm:$0xff]
    %v363 = vld [vmem:[#allocation7 + $0x6e8] sm:$0xff]
    %v364 = vld [vmem:[#allocation7 + $0x6f0] sm:$0xff]
    %v365 = vld [vmem:[#allocation7 + $0x6f8] sm:$0xff]
    %v366 = vld [vmem:[#allocation7 + $0x700] sm:$0xff]
    %v367 = vld [vmem:[#allocation7 + $0x708] sm:$0xff]
    %v368 = vld [vmem:[#allocation7 + $0x710] sm:$0xff]
    %v369 = vld [vmem:[#allocation7 + $0x718] sm:$0xff]
    %v370 = vld [vmem:[#allocation7 + $0x720] sm:$0xff]
    %v371 = vld [vmem:[#allocation7 + $0x728] sm:$0xff]
    %v372 = vld [vmem:[#allocation7 + $0x730] sm:$0xff]
    %v373 = vld [vmem:[#allocation7 + $0x738] sm:$0xff]
    %v374 = vld [vmem:[#allocation7 + $0x740] sm:$0xff]
    %v375 = vld [vmem:[#allocation7 + $0x748] sm:$0xff]
    %v376 = vld [vmem:[#allocation7 + $0x750] sm:$0xff]
    %v377 = vld [vmem:[#allocation7 + $0x758] sm:$0xff]
    %v378 = vld [vmem:[#allocation7 + $0x760] sm:$0xff]
    %v379 = vld [vmem:[#allocation7 + $0x768] sm:$0xff]
    %v380 = vld [vmem:[#allocation7 + $0x770] sm:$0xff]
    %v381 = vld [vmem:[#allocation7 + $0x778] sm:$0xff]
    %v382 = vld [vmem:[#allocation7 + $0x780] sm:$0xff]
    %v383 = vld [vmem:[#allocation7 + $0x788] sm:$0xff]
    %v384 = vld [vmem:[#allocation7 + $0x790] sm:$0xff]
    %v385 = vld [vmem:[#allocation7 + $0x798] sm:$0xff]
    %v386 = vld [vmem:[#allocation7 + $0x7a0] sm:$0xff]
    %v387 = vld [vmem:[#allocation7 + $0x7a8] sm:$0xff]
    %v388 = vld [vmem:[#allocation7 + $0x7b0] sm:$0xff]
    %v389 = vld [vmem:[#allocation7 + $0x7b8] sm:$0xff]
    %v390 = vld [vmem:[#allocation7 + $0x7c0] sm:$0xff]
    %v391 = vld [vmem:[#allocation7 + $0x7c8] sm:$0xff]
    %v392 = vld [vmem:[#allocation7 + $0x7d0] sm:$0xff]
    %v393 = vld [vmem:[#allocation7 + $0x7d8] sm:$0xff]
    %v394 = vld [vmem:[#allocation7 + $0x7e0] sm:$0xff]
    %v395 = vld [vmem:[#allocation7 + $0x7e8] sm:$0xff]
    %v396 = vld [vmem:[#allocation7 + $0x7f0] sm:$0xff]
    %v397 = vld [vmem:[#allocation7 + $0x7f8] sm:$0xff]
    %v398 = vld [vmem:[#allocation7 + $0x800] sm:$0xff]
    %v399 = vld [vmem:[#allocation7 + $0x808] sm:$0xff]
    %v400 = vld [vmem:[#allocation7 + $0x810] sm:$0xff]
    %v401 = vld [vmem:[#allocation7 + $0x818] sm:$0xff]
    %v402 = vld [vmem:[#allocation7 + $0x820] sm:$0xff]
    %v403 = vld [vmem:[#allocation7 + $0x828] sm:$0xff]
    %v404 = vld [vmem:[#allocation7 + $0x830] sm:$0xff]
    %v405 = vld [vmem:[#allocation7 + $0x838] sm:$0xff]
    %v406 = vld [vmem:[#allocation7 + $0x840] sm:$0xff]
    %v407 = vld [vmem:[#allocation7 + $0x848] sm:$0xff]
    %v408 = vld [vmem:[#allocation7 + $0x850] sm:$0xff]
    %v409 = vld [vmem:[#allocation7 + $0x858] sm:$0xff]
    %v410 = vld [vmem:[#allocation7 + $0x860] sm:$0xff]
    %v411 = vld [vmem:[#allocation7 + $0x868] sm:$0xff]
    %v412 = vld [vmem:[#allocation7 + $0x870] sm:$0xff]
    %v413 = vld [vmem:[#allocation7 + $0x878] sm:$0xff]
    %v414 = vld [vmem:[#allocation7 + $0x880] sm:$0xff]
    %v415 = vld [vmem:[#allocation7 + $0x888] sm:$0xff]
    %v416 = vld [vmem:[#allocation7 + $0x890] sm:$0xff]
    %v417 = vld [vmem:[#allocation7 + $0x898] sm:$0xff]
    %v418 = vld [vmem:[#allocation7 + $0x8a0] sm:$0xff]
    %v419 = vld [vmem:[#allocation7 + $0x8a8] sm:$0xff]
    %v420 = vld [vmem:[#allocation7 + $0x8b0] sm:$0xff]
    %v421 = vld [vmem:[#allocation7 + $0x8b8] sm:$0xff]
    %v422 = vld [vmem:[#allocation7 + $0x8c0] sm:$0xff]
    %v423 = vld [vmem:[#allocation7 + $0x8c8] sm:$0xff]
    %v424 = vld [vmem:[#allocation7 + $0x8d0] sm:$0xff]
    %v425 = vld [vmem:[#allocation7 + $0x8d8] sm:$0xff]
    %v426 = vld [vmem:[#allocation7 + $0x8e0] sm:$0xff]
    %v427 = vld [vmem:[#allocation7 + $0x8e8] sm:$0xff]
    %v428 = vld [vmem:[#allocation7 + $0x8f0] sm:$0xff]
    %v429 = vld [vmem:[#allocation7 + $0x8f8] sm:$0xff]
    %v430 = vld [vmem:[#allocation7 + $0x900] sm:$0xff]
    %v431 = vld [vmem:[#allocation7 + $0x908] sm:$0xff]
    %v432 = vld [vmem:[#allocation7 + $0x910] sm:$0xff]
    %v433 = vld [vmem:[#allocation7 + $0x918] sm:$0xff]
    %v434 = vld [vmem:[#allocation7 + $0x920] sm:$0xff]
    %v435 = vld [vmem:[#allocation7 + $0x928] sm:$0xff]
    %v436 = vld [vmem:[#allocation7 + $0x930] sm:$0xff]
    %v437 = vld [vmem:[#allocation7 + $0x938] sm:$0xff]
    %v438 = vld [vmem:[#allocation7 + $0x940] sm:$0xff]
    %v439 = vld [vmem:[#allocation7 + $0x948] sm:$0xff]
    %v440 = vld [vmem:[#allocation7 + $0x950] sm:$0xff]
    %v441 = vld [vmem:[#allocation7 + $0x958] sm:$0xff]
    %v442 = vld [vmem:[#allocation7 + $0x960] sm:$0xff]
    %v443 = vld [vmem:[#allocation7 + $0x968] sm:$0xff]
    %v444 = vld [vmem:[#allocation7 + $0x970] sm:$0xff]
    %v445 = vld [vmem:[#allocation7 + $0x978] sm:$0xff]
    %v446 = vld [vmem:[#allocation7 + $0x980] sm:$0xff]
    %v447 = vld [vmem:[#allocation7 + $0x988] sm:$0xff]
    %v448 = vld [vmem:[#allocation7 + $0x990] sm:$0xff]
    %v449 = vld [vmem:[#allocation7 + $0x998] sm:$0xff]
    %v450 = vld [vmem:[#allocation7 + $0x9a0] sm:$0xff]
    %v451 = vld [vmem:[#allocation7 + $0x9a8] sm:$0xff]
    %v452 = vld [vmem:[#allocation7 + $0x9b0] sm:$0xff]
    %v453 = vld [vmem:[#allocation7 + $0x9b8] sm:$0xff]
    %v454 = vld [vmem:[#allocation7 + $0x9c0] sm:$0xff]
    %v455 = vld [vmem:[#allocation7 + $0x9c8] sm:$0xff]
    %v456 = vld [vmem:[#allocation7 + $0x9d0] sm:$0xff]
    %v457 = vld [vmem:[#allocation7 + $0x9d8] sm:$0xff]
    %v458 = vld [vmem:[#allocation7 + $0x9e0] sm:$0xff]
    %v459 = vld [vmem:[#allocation7 + $0x9e8] sm:$0xff]
    %v460 = vld [vmem:[#allocation7 + $0x9f0] sm:$0xff]
    %v461 = vld [vmem:[#allocation7 + $0x9f8] sm:$0xff]
    %v462 = vld [vmem:[#allocation7 + $0xa00] sm:$0xff]
    %v463 = vld [vmem:[#allocation7 + $0xa08] sm:$0xff]
    %v464 = vld [vmem:[#allocation7 + $0xa10] sm:$0xff]
    %v465 = vld [vmem:[#allocation7 + $0xa18] sm:$0xff]
    %v466 = vld [vmem:[#allocation7 + $0xa20] sm:$0xff]
    %v467 = vld [vmem:[#allocation7 + $0xa28] sm:$0xff]
    %v468 = vld [vmem:[#allocation7 + $0xa30] sm:$0xff]
    %v469 = vld [vmem:[#allocation7 + $0xa38] sm:$0xff]
    %v470 = vld [vmem:[#allocation7 + $0xa40] sm:$0xff]
    %v471 = vld [vmem:[#allocation7 + $0xa48] sm:$0xff]
    %v472 = vld [vmem:[#allocation7 + $0xa50] sm:$0xff]
    %v473 = vld [vmem:[#allocation7 + $0xa58] sm:$0xff]
    %v474 = vld [vmem:[#allocation7 + $0xa60] sm:$0xff]
    %v475 = vld [vmem:[#allocation7 + $0xa68] sm:$0xff]
    %v476 = vld [vmem:[#allocation7 + $0xa70] sm:$0xff]
    %v477 = vld [vmem:[#allocation7 + $0xa78] sm:$0xff]
    %v478 = vld [vmem:[#allocation7 + $0xa80] sm:$0xff]
    %v479 = vld [vmem:[#allocation7 + $0xa88] sm:$0xff]
    %v480 = vld [vmem:[#allocation7 + $0xa90] sm:$0xff]
    %v481 = vld [vmem:[#allocation7 + $0xa98] sm:$0xff]
    %v482 = vld [vmem:[#allocation7 + $0xaa0] sm:$0xff]
    %v483 = vld [vmem:[#allocation7 + $0xaa8] sm:$0xff]
    %v484 = vld [vmem:[#allocation7 + $0xab0] sm:$0xff]
    %v485 = vld [vmem:[#allocation7 + $0xab8] sm:$0xff]
    %v486 = vld [vmem:[#allocation7 + $0xac0] sm:$0xff]
    %v487 = vld [vmem:[#allocation7 + $0xac8] sm:$0xff]
    %v488 = vld [vmem:[#allocation7 + $0xad0] sm:$0xff]
    %v489 = vld [vmem:[#allocation7 + $0xad8] sm:$0xff]
    %v490 = vld [vmem:[#allocation7 + $0xae0] sm:$0xff]
    %v491 = vld [vmem:[#allocation7 + $0xae8] sm:$0xff]
    %v492 = vld [vmem:[#allocation7 + $0xaf0] sm:$0xff]
    %v493 = vld [vmem:[#allocation7 + $0xaf8] sm:$0xff]
    %v494 = vld [vmem:[#allocation7 + $0xb00] sm:$0xff]
    %v495 = vld [vmem:[#allocation7 + $0xb08] sm:$0xff]
    %v496 = vld [vmem:[#allocation7 + $0xb10] sm:$0xff]
    %v497 = vld [vmem:[#allocation7 + $0xb18] sm:$0xff]
    %v498 = vld [vmem:[#allocation7 + $0xb20] sm:$0xff]
    %v499 = vld [vmem:[#allocation7 + $0xb28] sm:$0xff]
    %v500 = vld [vmem:[#allocation7 + $0xb30] sm:$0xff]
    %v501 = vld [vmem:[#allocation7 + $0xb38] sm:$0xff]
    %v502 = vld [vmem:[#allocation7 + $0xb40] sm:$0xff]
    %v503 = vld [vmem:[#allocation7 + $0xb48] sm:$0xff]
    %v504 = vld [vmem:[#allocation7 + $0xb50] sm:$0xff]
    %v505 = vld [vmem:[#allocation7 + $0xb58] sm:$0xff]
    %v506 = vld [vmem:[#allocation7 + $0xb60] sm:$0xff]
    %v507 = vld [vmem:[#allocation7 + $0xb68] sm:$0xff]
    %v508 = vld [vmem:[#allocation7 + $0xb70] sm:$0xff]
    %v509 = vld [vmem:[#allocation7 + $0xb78] sm:$0xff]
    %v510 = vld [vmem:[#allocation7 + $0xb80] sm:$0xff]
    %v511 = vld [vmem:[#allocation7 + $0xb88] sm:$0xff]
    %v512 = vld [vmem:[#allocation7 + $0xb90] sm:$0xff]
    %v513 = vld [vmem:[#allocation7 + $0xb98] sm:$0xff]
    %v514 = vld [vmem:[#allocation7 + $0xba0] sm:$0xff]
    %v515 = vld [vmem:[#allocation7 + $0xba8] sm:$0xff]
    %v516 = vld [vmem:[#allocation7 + $0xbb0] sm:$0xff]
    %v517 = vld [vmem:[#allocation7 + $0xbb8] sm:$0xff]
    %v518 = vld [vmem:[#allocation7 + $0xbc0] sm:$0xff]
    %v519 = vld [vmem:[#allocation7 + $0xbc8] sm:$0xff]
    %v520 = vld [vmem:[#allocation7 + $0xbd0] sm:$0xff]
    %v521 = vld [vmem:[#allocation7 + $0xbd8] sm:$0xff]
    %v522 = vld [vmem:[#allocation7 + $0xbe0] sm:$0xff]
    %v523 = vld [vmem:[#allocation7 + $0xbe8] sm:$0xff]
    %v524 = vld [vmem:[#allocation7 + $0xbf0] sm:$0xff]
    %v525 = vld [vmem:[#allocation7 + $0xbf8] sm:$0xff]
    %v526 = vld [vmem:[#allocation7 + $0xc00] sm:$0xff]
    %v527 = vld [vmem:[#allocation7 + $0xc08] sm:$0xff]
    %v528 = vld [vmem:[#allocation7 + $0xc10] sm:$0xff]
    %v529 = vld [vmem:[#allocation7 + $0xc18] sm:$0xff]
    %v530 = vld [vmem:[#allocation7 + $0xc20] sm:$0xff]
    %v531 = vld [vmem:[#allocation7 + $0xc28] sm:$0xff]
    %v532 = vld [vmem:[#allocation7 + $0xc30] sm:$0xff]
    %v533 = vld [vmem:[#allocation7 + $0xc38] sm:$0xff]
    %v534 = vld [vmem:[#allocation7 + $0xc40] sm:$0xff]
    %v535 = vld [vmem:[#allocation7 + $0xc48] sm:$0xff]
    %v536 = vld [vmem:[#allocation7 + $0xc50] sm:$0xff]
    %v537 = vld [vmem:[#allocation7 + $0xc58] sm:$0xff]
    %v538 = vld [vmem:[#allocation7 + $0xc60] sm:$0xff]
    %v539 = vld [vmem:[#allocation7 + $0xc68] sm:$0xff]
    %v540 = vld [vmem:[#allocation7 + $0xc70] sm:$0xff]
    %v541 = vld [vmem:[#allocation7 + $0xc78] sm:$0xff]
    %v542 = vld [vmem:[#allocation7 + $0xc80] sm:$0xff]
    %v543 = vld [vmem:[#allocation7 + $0xc88] sm:$0xff]
    %v544 = vld [vmem:[#allocation7 + $0xc90] sm:$0xff]
    %v545 = vld [vmem:[#allocation7 + $0xc98] sm:$0xff]
    %v546 = vld [vmem:[#allocation7 + $0xca0] sm:$0xff]
    %v547 = vld [vmem:[#allocation7 + $0xca8] sm:$0xff]
    %v548 = vld [vmem:[#allocation7 + $0xcb0] sm:$0xff]
    %v549 = vld [vmem:[#allocation7 + $0xcb8] sm:$0xff]
    %v550 = vld [vmem:[#allocation7 + $0xcc0] sm:$0xff]
    %v551 = vld [vmem:[#allocation7 + $0xcc8] sm:$0xff]
    %v552 = vld [vmem:[#allocation7 + $0xcd0] sm:$0xff]
    %v553 = vld [vmem:[#allocation7 + $0xcd8] sm:$0xff]
    %v554 = vld [vmem:[#allocation7 + $0xce0] sm:$0xff]
    %v555 = vld [vmem:[#allocation7 + $0xce8] sm:$0xff]
    %v556 = vld [vmem:[#allocation7 + $0xcf0] sm:$0xff]
    %v557 = vld [vmem:[#allocation7 + $0xcf8] sm:$0xff]
    %v558 = vld [vmem:[#allocation7 + $0xd00] sm:$0xff]
    %v559 = vld [vmem:[#allocation7 + $0xd08] sm:$0xff]
    %v560 = vld [vmem:[#allocation7 + $0xd10] sm:$0xff]
    %v561 = vld [vmem:[#allocation7 + $0xd18] sm:$0xff]
    %v562 = vld [vmem:[#allocation7 + $0xd20] sm:$0xff]
    %v563 = vld [vmem:[#allocation7 + $0xd28] sm:$0xff]
    %v564 = vld [vmem:[#allocation7 + $0xd30] sm:$0xff]
    %v565 = vld [vmem:[#allocation7 + $0xd38] sm:$0xff]
    %v566 = vld [vmem:[#allocation7 + $0xd40] sm:$0xff]
    %v567 = vld [vmem:[#allocation7 + $0xd48] sm:$0xff]
    %v568 = vld [vmem:[#allocation7 + $0xd50] sm:$0xff]
    %v569 = vld [vmem:[#allocation7 + $0xd58] sm:$0xff]
    %v570 = vld [vmem:[#allocation7 + $0xd60] sm:$0xff]
    %v571 = vld [vmem:[#allocation7 + $0xd68] sm:$0xff]
    %v572 = vld [vmem:[#allocation7 + $0xd70] sm:$0xff]
    %v573 = vld [vmem:[#allocation7 + $0xd78] sm:$0xff]
    %v574 = vld [vmem:[#allocation7 + $0xd80] sm:$0xff]
    %v575 = vld [vmem:[#allocation7 + $0xd88] sm:$0xff]
    %v576 = vld [vmem:[#allocation7 + $0xd90] sm:$0xff]
    %v577 = vld [vmem:[#allocation7 + $0xd98] sm:$0xff]
    %v578 = vld [vmem:[#allocation7 + $0xda0] sm:$0xff]
    %v579 = vld [vmem:[#allocation7 + $0xda8] sm:$0xff]
    %v580 = vld [vmem:[#allocation7 + $0xdb0] sm:$0xff]
    %v581 = vld [vmem:[#allocation7 + $0xdb8] sm:$0xff]
    %v582 = vld [vmem:[#allocation7 + $0xdc0] sm:$0xff]
    %v583 = vld [vmem:[#allocation7 + $0xdc8] sm:$0xff]
    %v584 = vld [vmem:[#allocation7 + $0xdd0] sm:$0xff]
    %v585 = vld [vmem:[#allocation7 + $0xdd8] sm:$0xff]
    %v586 = vld [vmem:[#allocation7 + $0xde0] sm:$0xff]
    %v587 = vld [vmem:[#allocation7 + $0xde8] sm:$0xff]
    %v588 = vld [vmem:[#allocation7 + $0xdf0] sm:$0xff]
    %v589 = vld [vmem:[#allocation7 + $0xdf8] sm:$0xff]
    %v590 = vld [vmem:[#allocation7 + $0xe00] sm:$0xff]
    %v591 = vld [vmem:[#allocation7 + $0xe08] sm:$0xff]
    %v592 = vld [vmem:[#allocation7 + $0xe10] sm:$0xff]
    %v593 = vld [vmem:[#allocation7 + $0xe18] sm:$0xff]
    %v594 = vld [vmem:[#allocation7 + $0xe20] sm:$0xff]
    %v595 = vld [vmem:[#allocation7 + $0xe28] sm:$0xff]
    %v596 = vld [vmem:[#allocation7 + $0xe30] sm:$0xff]
    %v597 = vld [vmem:[#allocation7 + $0xe38] sm:$0xff]
    %v598 = vld [vmem:[#allocation7 + $0xe40] sm:$0xff]
    %v599 = vld [vmem:[#allocation7 + $0xe48] sm:$0xff]
    %v600 = vld [vmem:[#allocation7 + $0xe50] sm:$0xff]
    %v601 = vld [vmem:[#allocation7 + $0xe58] sm:$0xff]
    %v602 = vld [vmem:[#allocation7 + $0xe60] sm:$0xff]
    %v603 = vld [vmem:[#allocation7 + $0xe68] sm:$0xff]
    %v604 = vld [vmem:[#allocation7 + $0xe70] sm:$0xff]
    %v605 = vld [vmem:[#allocation7 + $0xe78] sm:$0xff]
    %v606 = vld [vmem:[#allocation7 + $0xe80] sm:$0xff]
    %v607 = vld [vmem:[#allocation7 + $0xe88] sm:$0xff]
    %v608 = vld [vmem:[#allocation7 + $0xe90] sm:$0xff]
    %v609 = vld [vmem:[#allocation7 + $0xe98] sm:$0xff]
    %v610 = vld [vmem:[#allocation7 + $0xea0] sm:$0xff]
    %v611 = vld [vmem:[#allocation7 + $0xea8] sm:$0xff]
    %v612 = vld [vmem:[#allocation7 + $0xeb0] sm:$0xff]
    %v613 = vld [vmem:[#allocation7 + $0xeb8] sm:$0xff]
    %v614 = vld [vmem:[#allocation7 + $0xec0] sm:$0xff]
    %v615 = vld [vmem:[#allocation7 + $0xec8] sm:$0xff]
    %v616 = vld [vmem:[#allocation7 + $0xed0] sm:$0xff]
    %v617 = vld [vmem:[#allocation7 + $0xed8] sm:$0xff]
    %v618 = vld [vmem:[#allocation7 + $0xee0] sm:$0xff]
    %v619 = vld [vmem:[#allocation7 + $0xee8] sm:$0xff]
    %v620 = vld [vmem:[#allocation7 + $0xef0] sm:$0xff]
    %v621 = vld [vmem:[#allocation7 + $0xef8] sm:$0xff]
    %v622 = vld [vmem:[#allocation7 + $0xf00] sm:$0xff]
    %v623 = vld [vmem:[#allocation7 + $0xf08] sm:$0xff]
    %v624 = vld [vmem:[#allocation7 + $0xf10] sm:$0xff]
    %v625 = vld [vmem:[#allocation7 + $0xf18] sm:$0xff]
    %v626 = vld [vmem:[#allocation7 + $0xf20] sm:$0xff]
    %v627 = vld [vmem:[#allocation7 + $0xf28] sm:$0xff]
    %v628 = vld [vmem:[#allocation7 + $0xf30] sm:$0xff]
    %v629 = vld [vmem:[#allocation7 + $0xf38] sm:$0xff]
    %v630 = vld [vmem:[#allocation7 + $0xf40] sm:$0xff]
    %v631 = vld [vmem:[#allocation7 + $0xf48] sm:$0xff]
    %v632 = vld [vmem:[#allocation7 + $0xf50] sm:$0xff]
    %v633 = vld [vmem:[#allocation7 + $0xf58] sm:$0xff]
    %v634 = vld [vmem:[#allocation7 + $0xf60] sm:$0xff]
    %v635 = vld [vmem:[#allocation7 + $0xf68] sm:$0xff]
    %v636 = vld [vmem:[#allocation7 + $0xf70] sm:$0xff]
    %v637 = vld [vmem:[#allocation7 + $0xf78] sm:$0xff]
    %v638 = vld [vmem:[#allocation7 + $0xf80] sm:$0xff]
    %v639 = vld [vmem:[#allocation7 + $0xf88] sm:$0xff]
    %v640 = vld [vmem:[#allocation7 + $0xf90] sm:$0xff]
    %v641 = vld [vmem:[#allocation7 + $0xf98] sm:$0xff]
    %v642 = vld [vmem:[#allocation7 + $0xfa0] sm:$0xff]
    %v643 = vld [vmem:[#allocation7 + $0xfa8] sm:$0xff]
    %v644 = vld [vmem:[#allocation7 + $0xfb0] sm:$0xff]
    %v645 = vld [vmem:[#allocation7 + $0xfb8] sm:$0xff]
    %v646 = vld [vmem:[#allocation7 + $0xfc0] sm:$0xff]
    %v647 = vld [vmem:[#allocation7 + $0xfc8] sm:$0xff]
    %v648 = vld [vmem:[#allocation7 + $0xfd0] sm:$0xff]
    %v649 = vld [vmem:[#allocation7 + $0xfd8] sm:$0xff]
    %v650 = vld [vmem:[#allocation7 + $0xfe0] sm:$0xff]
    %v651 = vld [vmem:[#allocation7 + $0xfe8] sm:$0xff]
    %v652 = vld [vmem:[#allocation7 + $0xff0] sm:$0xff]
    %v653 = vld [vmem:[#allocation7 + $0xff8] sm:$0xff]
    %v654 = vld [vmem:[#allocation7 + $0x1000] sm:$0xff]
    %v655 = vld [vmem:[#allocation7 + $0x1008] sm:$0xff]
    %v656 = vld [vmem:[#allocation7 + $0x1010] sm:$0xff]
    %v657 = vld [vmem:[#allocation7 + $0x1018] sm:$0xff]
    %v658 = vld [vmem:[#allocation7 + $0x1020] sm:$0xff]
    %v659 = vld [vmem:[#allocation7 + $0x1028] sm:$0xff]
    %v660 = vld [vmem:[#allocation7 + $0x1030] sm:$0xff]
    %v661 = vld [vmem:[#allocation7 + $0x1038] sm:$0xff]
    %v662 = vld [vmem:[#allocation7 + $0x1040] sm:$0xff]
    %v663 = vld [vmem:[#allocation7 + $0x1048] sm:$0xff]
    %v664 = vld [vmem:[#allocation7 + $0x1050] sm:$0xff]
    %v665 = vld [vmem:[#allocation7 + $0x1058] sm:$0xff]
    %v666 = vld [vmem:[#allocation7 + $0x1060] sm:$0xff]
    %v667 = vld [vmem:[#allocation7 + $0x1068] sm:$0xff]
    %v668 = vld [vmem:[#allocation7 + $0x1070] sm:$0xff]
    %v669 = vld [vmem:[#allocation7 + $0x1078] sm:$0xff]
    %v670 = vld [vmem:[#allocation7 + $0x1080] sm:$0xff]
    %v671 = vld [vmem:[#allocation7 + $0x1088] sm:$0xff]
    %v672 = vld [vmem:[#allocation7 + $0x1090] sm:$0xff]
    %v673 = vld [vmem:[#allocation7 + $0x1098] sm:$0xff]
    %v674 = vld [vmem:[#allocation7 + $0x10a0] sm:$0xff]
    %v675 = vld [vmem:[#allocation7 + $0x10a8] sm:$0xff]
    %v676 = vld [vmem:[#allocation7 + $0x10b0] sm:$0xff]
    %v677 = vld [vmem:[#allocation7 + $0x10b8] sm:$0xff]
    %v678 = vld [vmem:[#allocation7 + $0x10c0] sm:$0xff]
    %v679 = vld [vmem:[#allocation7 + $0x10c8] sm:$0xff]
    %v680 = vld [vmem:[#allocation7 + $0x10d0] sm:$0xff]
    %v681 = vld [vmem:[#allocation7 + $0x10d8] sm:$0xff]
    %v682 = vld [vmem:[#allocation7 + $0x10e0] sm:$0xff]
    %v683 = vld [vmem:[#allocation7 + $0x10e8] sm:$0xff]
    %v684 = vld [vmem:[#allocation7 + $0x10f0] sm:$0xff]
    %v685 = vld [vmem:[#allocation7 + $0x10f8] sm:$0xff]
    %v686 = vld [vmem:[#allocation7 + $0x1100] sm:$0xff]
    %v687 = vld [vmem:[#allocation7 + $0x1108] sm:$0xff]
    %v688 = vld [vmem:[#allocation7 + $0x1110] sm:$0xff]
    %v689 = vld [vmem:[#allocation7 + $0x1118] sm:$0xff]
    %v690 = vld [vmem:[#allocation7 + $0x1120] sm:$0xff]
    %v691 = vld [vmem:[#allocation7 + $0x1128] sm:$0xff]
    %v692 = vld [vmem:[#allocation7 + $0x1130] sm:$0xff]
    %v693 = vld [vmem:[#allocation7 + $0x1138] sm:$0xff]
    %v694 = vld [vmem:[#allocation7 + $0x1140] sm:$0xff]
    %v695 = vld [vmem:[#allocation7 + $0x1148] sm:$0xff]
    %v696 = vld [vmem:[#allocation7 + $0x1150] sm:$0xff]
    %v697 = vld [vmem:[#allocation7 + $0x1158] sm:$0xff]
    %v698 = vld [vmem:[#allocation7 + $0x1160] sm:$0xff]
    %v699 = vld [vmem:[#allocation7 + $0x1168] sm:$0xff]
    %v700 = vld [vmem:[#allocation7 + $0x1170] sm:$0xff]
    %v701 = vld [vmem:[#allocation7 + $0x1178] sm:$0xff]
    %v702 = vld [vmem:[#allocation7 + $0x1180] sm:$0xff]
    %v703 = vld [vmem:[#allocation7 + $0x1188] sm:$0xff]
    %v704 = vld [vmem:[#allocation7 + $0x1190] sm:$0xff]
    %v705 = vld [vmem:[#allocation7 + $0x1198] sm:$0xff]
    %v706 = vld [vmem:[#allocation7 + $0x11a0] sm:$0xff]
    %v707 = vld [vmem:[#allocation7 + $0x11a8] sm:$0xff]
    %v708 = vld [vmem:[#allocation7 + $0x11b0] sm:$0xff]
    %v709 = vld [vmem:[#allocation7 + $0x11b8] sm:$0xff]
    %v710 = vld [vmem:[#allocation7 + $0x11c0] sm:$0xff]
    %v711 = vld [vmem:[#allocation7 + $0x11c8] sm:$0xff]
    %v712 = vld [vmem:[#allocation7 + $0x11d0] sm:$0xff]
    %v713 = vld [vmem:[#allocation7 + $0x11d8] sm:$0xff]
    %v714 = vld [vmem:[#allocation7 + $0x11e0] sm:$0xff]
    %v715 = vld [vmem:[#allocation7 + $0x11e8] sm:$0xff]
    %v716 = vld [vmem:[#allocation7 + $0x11f0] sm:$0xff]
    %v717 = vld [vmem:[#allocation7 + $0x11f8] sm:$0xff]
    %v718 = vld [vmem:[#allocation7 + $0x1200] sm:$0xff]
    %v719 = vld [vmem:[#allocation7 + $0x1208] sm:$0xff]
    %v720 = vld [vmem:[#allocation7 + $0x1210] sm:$0xff]
    %v721 = vld [vmem:[#allocation7 + $0x1218] sm:$0xff]
    %v722 = vld [vmem:[#allocation7 + $0x1220] sm:$0xff]
    %v723 = vld [vmem:[#allocation7 + $0x1228] sm:$0xff]
    %v724 = vld [vmem:[#allocation7 + $0x1230] sm:$0xff]
    %v725 = vld [vmem:[#allocation7 + $0x1238] sm:$0xff]
    %v726 = vld [vmem:[#allocation7 + $0x1240] sm:$0xff]
    %v727 = vld [vmem:[#allocation7 + $0x1248] sm:$0xff]
    %v728 = vld [vmem:[#allocation7 + $0x1250] sm:$0xff]
    %v729 = vld [vmem:[#allocation7 + $0x1258] sm:$0xff]
    %v730 = vld [vmem:[#allocation7 + $0x1260] sm:$0xff]
    %v731 = vld [vmem:[#allocation7 + $0x1268] sm:$0xff]
    %v732 = vld [vmem:[#allocation7 + $0x1270] sm:$0xff]
    %v733 = vld [vmem:[#allocation7 + $0x1278] sm:$0xff]
    %v734 = vld [vmem:[#allocation7 + $0x1280] sm:$0xff]
    %v735 = vld [vmem:[#allocation7 + $0x1288] sm:$0xff]
    %v736 = vld [vmem:[#allocation7 + $0x1290] sm:$0xff]
    %v737 = vld [vmem:[#allocation7 + $0x1298] sm:$0xff]
    %v738 = vld [vmem:[#allocation7 + $0x12a0] sm:$0xff]
    %v739 = vld [vmem:[#allocation7 + $0x12a8] sm:$0xff]
    %v740 = vld [vmem:[#allocation7 + $0x12b0] sm:$0xff]
    %v741 = vld [vmem:[#allocation7 + $0x12b8] sm:$0xff]
    %v742 = vld [vmem:[#allocation7 + $0x12c0] sm:$0xff]
    %v743 = vld [vmem:[#allocation7 + $0x12c8] sm:$0xff]
    %v744 = vld [vmem:[#allocation7 + $0x12d0] sm:$0xff]
    %v745 = vld [vmem:[#allocation7 + $0x12d8] sm:$0xff]
    %v746 = vld [vmem:[#allocation7 + $0x12e0] sm:$0xff]
    %v747 = vld [vmem:[#allocation7 + $0x12e8] sm:$0xff]
    %v748 = vld [vmem:[#allocation7 + $0x12f0] sm:$0xff]
    %v749 = vld [vmem:[#allocation7 + $0x12f8] sm:$0xff]
    %v750 = vld [vmem:[#allocation7 + $0x1300] sm:$0xff]
    %v751 = vld [vmem:[#allocation7 + $0x1308] sm:$0xff]
    %v752 = vld [vmem:[#allocation7 + $0x1310] sm:$0xff]
    %v753 = vld [vmem:[#allocation7 + $0x1318] sm:$0xff]
    %v754 = vld [vmem:[#allocation7 + $0x1320] sm:$0xff]
    %v755 = vld [vmem:[#allocation7 + $0x1328] sm:$0xff]
    %v756 = vld [vmem:[#allocation7 + $0x1330] sm:$0xff]
    %v757 = vld [vmem:[#allocation7 + $0x1338] sm:$0xff]
    %v758 = vld [vmem:[#allocation7 + $0x1340] sm:$0xff]
    %v759 = vld [vmem:[#allocation7 + $0x1348] sm:$0xff]
    %v760 = vld [vmem:[#allocation7 + $0x1350] sm:$0xff]
    %v761 = vld [vmem:[#allocation7 + $0x1358] sm:$0xff]
    %v762 = vld [vmem:[#allocation7 + $0x1360] sm:$0xff]
    %v763 = vld [vmem:[#allocation7 + $0x1368] sm:$0xff]
    %v764 = vld [vmem:[#allocation7 + $0x1370] sm:$0xff]
    %v765 = vld [vmem:[#allocation7 + $0x1378] sm:$0xff]
    %v766 = vld [vmem:[#allocation7 + $0x1380] sm:$0xff]
    %v767 = vld [vmem:[#allocation7 + $0x1388] sm:$0xff]
    %v768 = vld [vmem:[#allocation7 + $0x1390] sm:$0xff]
    %v769 = vld [vmem:[#allocation7 + $0x1398] sm:$0xff]
    %v770 = vld [vmem:[#allocation7 + $0x13a0] sm:$0xff]
    %v771 = vld [vmem:[#allocation7 + $0x13a8] sm:$0xff]
    %v772 = vld [vmem:[#allocation7 + $0x13b0] sm:$0xff]
    %v773 = vld [vmem:[#allocation7 + $0x13b8] sm:$0xff]
    %v774 = vld [vmem:[#allocation7 + $0x13c0] sm:$0xff]
    %v775 = vld [vmem:[#allocation7 + $0x13c8] sm:$0xff]
    %v776 = vld [vmem:[#allocation7 + $0x13d0] sm:$0xff]
    %v777 = vld [vmem:[#allocation7 + $0x13d8] sm:$0xff]
    %v778 = vld [vmem:[#allocation7 + $0x13e0] sm:$0xff]
    %v779 = vld [vmem:[#allocation7 + $0x13e8] sm:$0xff]
    %v780 = vld [vmem:[#allocation7 + $0x13f0] sm:$0xff]
    %v781 = vld [vmem:[#allocation7 + $0x13f8] sm:$0xff]
    %v782 = vld [vmem:[#allocation7 + $0x1400] sm:$0xff]
    %v783 = vld [vmem:[#allocation7 + $0x1408] sm:$0xff]
    %v784 = vld [vmem:[#allocation7 + $0x1410] sm:$0xff]
    %v785 = vld [vmem:[#allocation7 + $0x1418] sm:$0xff]
    %v786 = vld [vmem:[#allocation7 + $0x1420] sm:$0xff]
    %v787 = vld [vmem:[#allocation7 + $0x1428] sm:$0xff]
    %v788 = vld [vmem:[#allocation7 + $0x1430] sm:$0xff]
    %v789 = vld [vmem:[#allocation7 + $0x1438] sm:$0xff]
    %v790 = vld [vmem:[#allocation7 + $0x1440] sm:$0xff]
    %v791 = vld [vmem:[#allocation7 + $0x1448] sm:$0xff]
    %v792 = vld [vmem:[#allocation7 + $0x1450] sm:$0xff]
    %v793 = vld [vmem:[#allocation7 + $0x1458] sm:$0xff]
    %v794 = vld [vmem:[#allocation7 + $0x1460] sm:$0xff]
    %v795 = vld [vmem:[#allocation7 + $0x1468] sm:$0xff]
    %v796 = vld [vmem:[#allocation7 + $0x1470] sm:$0xff]
    %v797 = vld [vmem:[#allocation7 + $0x1478] sm:$0xff]
    %v798 = vld [vmem:[#allocation7 + $0x1480] sm:$0xff]
    %v799 = vld [vmem:[#allocation7 + $0x1488] sm:$0xff]
    %v800 = vld [vmem:[#allocation7 + $0x1490] sm:$0xff]
    %v801 = vld [vmem:[#allocation7 + $0x1498] sm:$0xff]
    %v802 = vld [vmem:[#allocation7 + $0x14a0] sm:$0x7]
    %v803 = vld [vmem:[#allocation7 + $0x14a8] sm:$0x7]
    %v804 = vld [vmem:[#allocation7 + $0x14b0] sm:$0x7]
    %v805 = vld [vmem:[#allocation7 + $0x14b8] sm:$0x7]
    %v806 = vld [vmem:[#allocation9] sm:$0xf]
    %v808 = vperm.slane %v806, 0
    %v809 = vperm.slane %v806, 1
    %v810 = vperm.slane %v806, 2
    %v811 = vperm.slane %v806, 3
    %vm816 = vcmask 351232
    %v818 = vsel %vm816, %v141, 0
    %vm820 = vcmask 1042432
    %v822 = vsel %vm820, %v802, 0
    %v825 = vsel %vm820, %v803, 0
    %v828 = vsel %vm820, %v804, 0
    %v831 = vsel %vm820, %v805, 0
    %833 = vmatpush.msra.mxu0 %v202
    %834 = vmatpush.msra.mxu0 %v198
    %835 = vmatpush.msra.mxu0 %v194
    %836 = vmatpush.msra.mxu0 %v190
    %837 = vmatpush.msra.mxu0 %v186
    %838 = vmatpush.msra.mxu0 %v182
    %839 = vmatpush.msra.mxu0 %v178
    %840 = vmatpush.msra.mxu0 %v174
    %841 = vmatpush.msra.mxu0 %v170
    %842 = vmatpush.msra.mxu0 %v166
    %843 = vmatpush.msra.mxu0 %v162
    %844 = vmatpush.msra.mxu0 %v158
    %845 = vmatpush.msra.mxu0 %v154
    %846 = vmatpush.msra.mxu0 %v150
    %847 = vmatpush.msra.mxu0 %v146
    %848 = vmatpush.msra.mxu0 %v142
    %849 = vmatmul.f32.gmra.mxu0 %v131
    %v850 = vpop.f32.mrf.mxu0
    %v851 = vadd.f32 %v808, %v850
    %852 = vdwg.mxu0
    %853 = vmatpush.msra.mxu0 %v266
    %854 = vmatpush.msra.mxu0 %v262
    %855 = vmatpush.msra.mxu0 %v258
    %856 = vmatpush.msra.mxu0 %v254
    %857 = vmatpush.msra.mxu0 %v250
    %858 = vmatpush.msra.mxu0 %v246
    %859 = vmatpush.msra.mxu0 %v242
    %860 = vmatpush.msra.mxu0 %v238
    %861 = vmatpush.msra.mxu0 %v234
    %862 = vmatpush.msra.mxu0 %v230
    %863 = vmatpush.msra.mxu0 %v226
    %864 = vmatpush.msra.mxu0 %v222
    %865 = vmatpush.msra.mxu0 %v218
    %866 = vmatpush.msra.mxu0 %v214
    %867 = vmatpush.msra.mxu0 %v210
    %868 = vmatpush.msra.mxu0 %v206
    %869 = vmatmul.f32.gmra.mxu0 %v132
    %v870 = vpop.f32.mrf.mxu0
    %v871 = vadd.f32 %v851, %v870
    %872 = vdwg.mxu0
    %873 = vmatpush.msra.mxu0 %v330
    %874 = vmatpush.msra.mxu0 %v326
    %875 = vmatpush.msra.mxu0 %v322
    %876 = vmatpush.msra.mxu0 %v318
    %877 = vmatpush.msra.mxu0 %v314
    %878 = vmatpush.msra.mxu0 %v310
    %879 = vmatpush.msra.mxu0 %v306
    %880 = vmatpush.msra.mxu0 %v302
    %881 = vmatpush.msra.mxu0 %v298
    %882 = vmatpush.msra.mxu0 %v294
    %883 = vmatpush.msra.mxu0 %v290
    %884 = vmatpush.msra.mxu0 %v286
    %885 = vmatpush.msra.mxu0 %v282
    %886 = vmatpush.msra.mxu0 %v278
    %887 = vmatpush.msra.mxu0 %v274
    %888 = vmatpush.msra.mxu0 %v270
    %889 = vmatmul.f32.gmra.mxu0 %v133
    %v890 = vpop.f32.mrf.mxu0
    %v891 = vadd.f32 %v871, %v890
    %892 = vdwg.mxu0
    %893 = vmatpush.msra.mxu0 %v394
    %894 = vmatpush.msra.mxu0 %v390
    %895 = vmatpush.msra.mxu0 %v386
    %896 = vmatpush.msra.mxu0 %v382
    %897 = vmatpush.msra.mxu0 %v378
    %898 = vmatpush.msra.mxu0 %v374
    %899 = vmatpush.msra.mxu0 %v370
    %900 = vmatpush.msra.mxu0 %v366
    %901 = vmatpush.msra.mxu0 %v362
    %902 = vmatpush.msra.mxu0 %v358
    %903 = vmatpush.msra.mxu0 %v354
    %904 = vmatpush.msra.mxu0 %v350
    %905 = vmatpush.msra.mxu0 %v346
    %906 = vmatpush.msra.mxu0 %v342
    %907 = vmatpush.msra.mxu0 %v338
    %908 = vmatpush.msra.mxu0 %v334
    %909 = vmatmul.f32.gmra.mxu0 %v134
    %v910 = vpop.f32.mrf.mxu0
    %v911 = vadd.f32 %v891, %v910
    %912 = vdwg.mxu0
    %913 = vmatpush.msra.mxu0 %v458
    %914 = vmatpush.msra.mxu0 %v454
    %915 = vmatpush.msra.mxu0 %v450
    %916 = vmatpush.msra.mxu0 %v446
    %917 = vmatpush.msra.mxu0 %v442
    %918 = vmatpush.msra.mxu0 %v438
    %919 = vmatpush.msra.mxu0 %v434
    %920 = vmatpush.msra.mxu0 %v430
    %921 = vmatpush.msra.mxu0 %v426
    %922 = vmatpush.msra.mxu0 %v422
    %923 = vmatpush.msra.mxu0 %v418
    %924 = vmatpush.msra.mxu0 %v414
    %925 = vmatpush.msra.mxu0 %v410
    %926 = vmatpush.msra.mxu0 %v406
    %927 = vmatpush.msra.mxu0 %v402
    %928 = vmatpush.msra.mxu0 %v398
    %929 = vmatmul.f32.gmra.mxu0 %v135
    %v930 = vpop.f32.mrf.mxu0
    %v931 = vadd.f32 %v911, %v930
    %932 = vdwg.mxu0
    %933 = vmatpush.msra.mxu0 %v522
    %934 = vmatpush.msra.mxu0 %v518
    %935 = vmatpush.msra.mxu0 %v514
    %936 = vmatpush.msra.mxu0 %v510
    %937 = vmatpush.msra.mxu0 %v506
    %938 = vmatpush.msra.mxu0 %v502
    %939 = vmatpush.msra.mxu0 %v498
    %940 = vmatpush.msra.mxu0 %v494
    %941 = vmatpush.msra.mxu0 %v490
    %942 = vmatpush.msra.mxu0 %v486
    %943 = vmatpush.msra.mxu0 %v482
    %944 = vmatpush.msra.mxu0 %v478
    %945 = vmatpush.msra.mxu0 %v474
    %946 = vmatpush.msra.mxu0 %v470
    %947 = vmatpush.msra.mxu0 %v466
    %948 = vmatpush.msra.mxu0 %v462
    %949 = vmatmul.f32.gmra.mxu0 %v136
    %v950 = vpop.f32.mrf.mxu0
    %v951 = vadd.f32 %v931, %v950
    %952 = vdwg.mxu0
    %953 = vmatpush.msra.mxu0 %v586
    %954 = vmatpush.msra.mxu0 %v582
    %955 = vmatpush.msra.mxu0 %v578
    %956 = vmatpush.msra.mxu0 %v574
    %957 = vmatpush.msra.mxu0 %v570
    %958 = vmatpush.msra.mxu0 %v566
    %959 = vmatpush.msra.mxu0 %v562
    %960 = vmatpush.msra.mxu0 %v558
    %961 = vmatpush.msra.mxu0 %v554
    %962 = vmatpush.msra.mxu0 %v550
    %963 = vmatpush.msra.mxu0 %v546
    %964 = vmatpush.msra.mxu0 %v542
    %965 = vmatpush.msra.mxu0 %v538
    %966 = vmatpush.msra.mxu0 %v534
    %967 = vmatpush.msra.mxu0 %v530
    %968 = vmatpush.msra.mxu0 %v526
    %969 = vmatmul.f32.gmra.mxu0 %v137
    %v970 = vpop.f32.mrf.mxu0
    %v971 = vadd.f32 %v951, %v970
    %972 = vdwg.mxu0
    %973 = vmatpush.msra.mxu0 %v650
    %974 = vmatpush.msra.mxu0 %v646
    %975 = vmatpush.msra.mxu0 %v642
    %976 = vmatpush.msra.mxu0 %v638
    %977 = vmatpush.msra.mxu0 %v634
    %978 = vmatpush.msra.mxu0 %v630
    %979 = vmatpush.msra.mxu0 %v626
    %980 = vmatpush.msra.mxu0 %v622
    %981 = vmatpush.msra.mxu0 %v618
    %982 = vmatpush.msra.mxu0 %v614
    %983 = vmatpush.msra.mxu0 %v610
    %984 = vmatpush.msra.mxu0 %v606
    %985 = vmatpush.msra.mxu0 %v602
    %986 = vmatpush.msra.mxu0 %v598
    %987 = vmatpush.msra.mxu0 %v594
    %988 = vmatpush.msra.mxu0 %v590
    %989 = vmatmul.f32.gmra.mxu0 %v138
    %v990 = vpop.f32.mrf.mxu0
    %v991 = vadd.f32 %v971, %v990
    %992 = vdwg.mxu0
    %993 = vmatpush.msra.mxu0 %v714
    %994 = vmatpush.msra.mxu0 %v710
    %995 = vmatpush.msra.mxu0 %v706
    %996 = vmatpush.msra.mxu0 %v702
    %997 = vmatpush.msra.mxu0 %v698
    %998 = vmatpush.msra.mxu0 %v694
    %999 = vmatpush.msra.mxu0 %v690
    %1000 = vmatpush.msra.mxu0 %v686
    %1001 = vmatpush.msra.mxu0 %v682
    %1002 = vmatpush.msra.mxu0 %v678
    %1003 = vmatpush.msra.mxu0 %v674
    %1004 = vmatpush.msra.mxu0 %v670
    %1005 = vmatpush.msra.mxu0 %v666
    %1006 = vmatpush.msra.mxu0 %v662
    %1007 = vmatpush.msra.mxu0 %v658
    %1008 = vmatpush.msra.mxu0 %v654
    %1009 = vmatmul.f32.gmra.mxu0 %v139
    %v1010 = vpop.f32.mrf.mxu0
    %v1011 = vadd.f32 %v991, %v1010
    %1012 = vdwg.mxu0
    %1013 = vmatpush.msra.mxu0 %v778
    %1014 = vmatpush.msra.mxu0 %v774
    %1015 = vmatpush.msra.mxu0 %v770
    %1016 = vmatpush.msra.mxu0 %v766
    %1017 = vmatpush.msra.mxu0 %v762
    %1018 = vmatpush.msra.mxu0 %v758
    %1019 = vmatpush.msra.mxu0 %v754
    %1020 = vmatpush.msra.mxu0 %v750
    %1021 = vmatpush.msra.mxu0 %v746
    %1022 = vmatpush.msra.mxu0 %v742
    %1023 = vmatpush.msra.mxu0 %v738
    %1024 = vmatpush.msra.mxu0 %v734
    %1025 = vmatpush.msra.mxu0 %v730
    %1026 = vmatpush.msra.mxu0 %v726
    %1027 = vmatpush.msra.mxu0 %v722
    %1028 = vmatpush.msra.mxu0 %v718
    %1029 = vmatmul.f32.gmra.mxu0 %v140
    %v1030 = vpop.f32.mrf.mxu0
    %v1031 = vadd.f32 %v1011, %v1030
    %1032 = vdwg.mxu0
    %1033 = vmatpush.msra.mxu0 0.0
    %1034 = vmatpush.msra.mxu0 0.0
    %1035 = vmatpush.msra.mxu0 0.0
    %1036 = vmatpush.msra.mxu0 0.0
    %1037 = vmatpush.msra.mxu0 0.0
    %1038 = vmatpush.msra.mxu0 0.0
    %1039 = vmatpush.msra.mxu0 0.0
    %1040 = vmatpush.msra.mxu0 0.0
    %1041 = vmatpush.msra.mxu0 0.0
    %1042 = vmatpush.msra.mxu0 0.0
    %1043 = vmatpush.msra.mxu0 %v822
    %1044 = vmatpush.msra.mxu0 %v798
    %1045 = vmatpush.msra.mxu0 %v794
    %1046 = vmatpush.msra.mxu0 %v790
    %1047 = vmatpush.msra.mxu0 %v786
    %1048 = vmatpush.msra.mxu0 %v782
    %1049 = vmatmul.f32.gmra.mxu0 %v818
    %v1050 = vpop.f32.mrf.mxu0
    %v1051 = vadd.f32 %v1031, %v1050
    %1052 = vdwg.mxu0
    %1053 = vmatpush.msra.mxu0 %v203
    %1054 = vmatpush.msra.mxu0 %v199
    %1055 = vmatpush.msra.mxu0 %v195
    %1056 = vmatpush.msra.mxu0 %v191
    %1057 = vmatpush.msra.mxu0 %v187
    %1058 = vmatpush.msra.mxu0 %v183
    %1059 = vmatpush.msra.mxu0 %v179
    %1060 = vmatpush.msra.mxu0 %v175
    %1061 = vmatpush.msra.mxu0 %v171
    %1062 = vmatpush.msra.mxu0 %v167
    %1063 = vmatpush.msra.mxu0 %v163
    %1064 = vmatpush.msra.mxu0 %v159
    %1065 = vmatpush.msra.mxu0 %v155
    %1066 = vmatpush.msra.mxu0 %v151
    %1067 = vmatpush.msra.mxu0 %v147
    %1068 = vmatpush.msra.mxu0 %v143
    %1069 = vmatmul.f32.gmra.mxu0 %v131
    %v1070 = vpop.f32.mrf.mxu0
    %v1071 = vadd.f32 %v809, %v1070
    %1072 = vdwg.mxu0
    %1073 = vmatpush.msra.mxu0 %v267
    %1074 = vmatpush.msra.mxu0 %v263
    %1075 = vmatpush.msra.mxu0 %v259
    %1076 = vmatpush.msra.mxu0 %v255
    %1077 = vmatpush.msra.mxu0 %v251
    %1078 = vmatpush.msra.mxu0 %v247
    %1079 = vmatpush.msra.mxu0 %v243
    %1080 = vmatpush.msra.mxu0 %v239
    %1081 = vmatpush.msra.mxu0 %v235
    %1082 = vmatpush.msra.mxu0 %v231
    %1083 = vmatpush.msra.mxu0 %v227
    %1084 = vmatpush.msra.mxu0 %v223
    %1085 = vmatpush.msra.mxu0 %v219
    %1086 = vmatpush.msra.mxu0 %v215
    %1087 = vmatpush.msra.mxu0 %v211
    %1088 = vmatpush.msra.mxu0 %v207
    %1089 = vmatmul.f32.gmra.mxu0 %v132
    %v1090 = vpop.f32.mrf.mxu0
    %v1091 = vadd.f32 %v1071, %v1090
    %1092 = vdwg.mxu0
    %1093 = vmatpush.msra.mxu0 %v331
    %1094 = vmatpush.msra.mxu0 %v327
    %1095 = vmatpush.msra.mxu0 %v323
    %1096 = vmatpush.msra.mxu0 %v319
    %1097 = vmatpush.msra.mxu0 %v315
    %1098 = vmatpush.msra.mxu0 %v311
    %1099 = vmatpush.msra.mxu0 %v307
    %1100 = vmatpush.msra.mxu0 %v303
    %1101 = vmatpush.msra.mxu0 %v299
    %1102 = vmatpush.msra.mxu0 %v295
    %1103 = vmatpush.msra.mxu0 %v291
    %1104 = vmatpush.msra.mxu0 %v287
    %1105 = vmatpush.msra.mxu0 %v283
    %1106 = vmatpush.msra.mxu0 %v279
    %1107 = vmatpush.msra.mxu0 %v275
    %1108 = vmatpush.msra.mxu0 %v271
    %1109 = vmatmul.f32.gmra.mxu0 %v133
    %v1110 = vpop.f32.mrf.mxu0
    %v1111 = vadd.f32 %v1091, %v1110
    %1112 = vdwg.mxu0
    %1113 = vmatpush.msra.mxu0 %v395
    %1114 = vmatpush.msra.mxu0 %v391
    %1115 = vmatpush.msra.mxu0 %v387
    %1116 = vmatpush.msra.mxu0 %v383
    %1117 = vmatpush.msra.mxu0 %v379
    %1118 = vmatpush.msra.mxu0 %v375
    %1119 = vmatpush.msra.mxu0 %v371
    %1120 = vmatpush.msra.mxu0 %v367
    %1121 = vmatpush.msra.mxu0 %v363
    %1122 = vmatpush.msra.mxu0 %v359
    %1123 = vmatpush.msra.mxu0 %v355
    %1124 = vmatpush.msra.mxu0 %v351
    %1125 = vmatpush.msra.mxu0 %v347
    %1126 = vmatpush.msra.mxu0 %v343
    %1127 = vmatpush.msra.mxu0 %v339
    %1128 = vmatpush.msra.mxu0 %v335
    %1129 = vmatmul.f32.gmra.mxu0 %v134
    %v1130 = vpop.f32.mrf.mxu0
    %v1131 = vadd.f32 %v1111, %v1130
    %1132 = vdwg.mxu0
    %1133 = vmatpush.msra.mxu0 %v459
    %1134 = vmatpush.msra.mxu0 %v455
    %1135 = vmatpush.msra.mxu0 %v451
    %1136 = vmatpush.msra.mxu0 %v447
    %1137 = vmatpush.msra.mxu0 %v443
    %1138 = vmatpush.msra.mxu0 %v439
    %1139 = vmatpush.msra.mxu0 %v435
    %1140 = vmatpush.msra.mxu0 %v431
    %1141 = vmatpush.msra.mxu0 %v427
    %1142 = vmatpush.msra.mxu0 %v423
    %1143 = vmatpush.msra.mxu0 %v419
    %1144 = vmatpush.msra.mxu0 %v415
    %1145 = vmatpush.msra.mxu0 %v411
    %1146 = vmatpush.msra.mxu0 %v407
    %1147 = vmatpush.msra.mxu0 %v403
    %1148 = vmatpush.msra.mxu0 %v399
    %1149 = vmatmul.f32.gmra.mxu0 %v135
    %v1150 = vpop.f32.mrf.mxu0
    %v1151 = vadd.f32 %v1131, %v1150
    %1152 = vdwg.mxu0
    %1153 = vmatpush.msra.mxu0 %v523
    %1154 = vmatpush.msra.mxu0 %v519
    %1155 = vmatpush.msra.mxu0 %v515
    %1156 = vmatpush.msra.mxu0 %v511
    %1157 = vmatpush.msra.mxu0 %v507
    %1158 = vmatpush.msra.mxu0 %v503
    %1159 = vmatpush.msra.mxu0 %v499
    %1160 = vmatpush.msra.mxu0 %v495
    %1161 = vmatpush.msra.mxu0 %v491
    %1162 = vmatpush.msra.mxu0 %v487
    %1163 = vmatpush.msra.mxu0 %v483
    %1164 = vmatpush.msra.mxu0 %v479
    %1165 = vmatpush.msra.mxu0 %v475
    %1166 = vmatpush.msra.mxu0 %v471
    %1167 = vmatpush.msra.mxu0 %v467
    %1168 = vmatpush.msra.mxu0 %v463
    %1169 = vmatmul.f32.gmra.mxu0 %v136
    %v1170 = vpop.f32.mrf.mxu0
    %v1171 = vadd.f32 %v1151, %v1170
    %1172 = vdwg.mxu0
    %1173 = vmatpush.msra.mxu0 %v587
    %1174 = vmatpush.msra.mxu0 %v583
    %1175 = vmatpush.msra.mxu0 %v579
    %1176 = vmatpush.msra.mxu0 %v575
    %1177 = vmatpush.msra.mxu0 %v571
    %1178 = vmatpush.msra.mxu0 %v567
    %1179 = vmatpush.msra.mxu0 %v563
    %1180 = vmatpush.msra.mxu0 %v559
    %1181 = vmatpush.msra.mxu0 %v555
    %1182 = vmatpush.msra.mxu0 %v551
    %1183 = vmatpush.msra.mxu0 %v547
    %1184 = vmatpush.msra.mxu0 %v543
    %1185 = vmatpush.msra.mxu0 %v539
    %1186 = vmatpush.msra.mxu0 %v535
    %1187 = vmatpush.msra.mxu0 %v531
    %1188 = vmatpush.msra.mxu0 %v527
    %1189 = vmatmul.f32.gmra.mxu0 %v137
    %v1190 = vpop.f32.mrf.mxu0
    %v1191 = vadd.f32 %v1171, %v1190
    %1192 = vdwg.mxu0
    %1193 = vmatpush.msra.mxu0 %v651
    %1194 = vmatpush.msra.mxu0 %v647
    %1195 = vmatpush.msra.mxu0 %v643
    %1196 = vmatpush.msra.mxu0 %v639
    %1197 = vmatpush.msra.mxu0 %v635
    %1198 = vmatpush.msra.mxu0 %v631
    %1199 = vmatpush.msra.mxu0 %v627
    %1200 = vmatpush.msra.mxu0 %v623
    %1201 = vmatpush.msra.mxu0 %v619
    %1202 = vmatpush.msra.mxu0 %v615
    %1203 = vmatpush.msra.mxu0 %v611
    %1204 = vmatpush.msra.mxu0 %v607
    %1205 = vmatpush.msra.mxu0 %v603
    %1206 = vmatpush.msra.mxu0 %v599
    %1207 = vmatpush.msra.mxu0 %v595
    %1208 = vmatpush.msra.mxu0 %v591
    %1209 = vmatmul.f32.gmra.mxu0 %v138
    %v1210 = vpop.f32.mrf.mxu0
    %v1211 = vadd.f32 %v1191, %v1210
    %1212 = vdwg.mxu0
    %1213 = vmatpush.msra.mxu0 %v715
    %1214 = vmatpush.msra.mxu0 %v711
    %1215 = vmatpush.msra.mxu0 %v707
    %1216 = vmatpush.msra.mxu0 %v703
    %1217 = vmatpush.msra.mxu0 %v699
    %1218 = vmatpush.msra.mxu0 %v695
    %1219 = vmatpush.msra.mxu0 %v691
    %1220 = vmatpush.msra.mxu0 %v687
    %1221 = vmatpush.msra.mxu0 %v683
    %1222 = vmatpush.msra.mxu0 %v679
    %1223 = vmatpush.msra.mxu0 %v675
    %1224 = vmatpush.msra.mxu0 %v671
    %1225 = vmatpush.msra.mxu0 %v667
    %1226 = vmatpush.msra.mxu0 %v663
    %1227 = vmatpush.msra.mxu0 %v659
    %1228 = vmatpush.msra.mxu0 %v655
    %1229 = vmatmul.f32.gmra.mxu0 %v139
    %v1230 = vpop.f32.mrf.mxu0
    %v1231 = vadd.f32 %v1211, %v1230
    %1232 = vdwg.mxu0
    %1233 = vmatpush.msra.mxu0 %v779
    %1234 = vmatpush.msra.mxu0 %v775
    %1235 = vmatpush.msra.mxu0 %v771
    %1236 = vmatpush.msra.mxu0 %v767
    %1237 = vmatpush.msra.mxu0 %v763
    %1238 = vmatpush.msra.mxu0 %v759
    %1239 = vmatpush.msra.mxu0 %v755
    %1240 = vmatpush.msra.mxu0 %v751
    %1241 = vmatpush.msra.mxu0 %v747
    %1242 = vmatpush.msra.mxu0 %v743
    %1243 = vmatpush.msra.mxu0 %v739
    %1244 = vmatpush.msra.mxu0 %v735
    %1245 = vmatpush.msra.mxu0 %v731
    %1246 = vmatpush.msra.mxu0 %v727
    %1247 = vmatpush.msra.mxu0 %v723
    %1248 = vmatpush.msra.mxu0 %v719
    %1249 = vmatmul.f32.gmra.mxu0 %v140
    %v1250 = vpop.f32.mrf.mxu0
    %v1251 = vadd.f32 %v1231, %v1250
    %1252 = vdwg.mxu0
    %1253 = vmatpush.msra.mxu0 0.0
    %1254 = vmatpush.msra.mxu0 0.0
    %1255 = vmatpush.msra.mxu0 0.0
    %1256 = vmatpush.msra.mxu0 0.0
    %1257 = vmatpush.msra.mxu0 0.0
    %1258 = vmatpush.msra.mxu0 0.0
    %1259 = vmatpush.msra.mxu0 0.0
    %1260 = vmatpush.msra.mxu0 0.0
    %1261 = vmatpush.msra.mxu0 0.0
    %1262 = vmatpush.msra.mxu0 0.0
    %1263 = vmatpush.msra.mxu0 %v825
    %1264 = vmatpush.msra.mxu0 %v799
    %1265 = vmatpush.msra.mxu0 %v795
    %1266 = vmatpush.msra.mxu0 %v791
    %1267 = vmatpush.msra.mxu0 %v787
    %1268 = vmatpush.msra.mxu0 %v783
    %1269 = vmatmul.f32.gmra.mxu0 %v818
    %v1270 = vpop.f32.mrf.mxu0
    %v1271 = vadd.f32 %v1251, %v1270
    %1272 = vdwg.mxu0
    %1273 = vmatpush.msra.mxu0 %v204
    %1274 = vmatpush.msra.mxu0 %v200
    %1275 = vmatpush.msra.mxu0 %v196
    %1276 = vmatpush.msra.mxu0 %v192
    %1277 = vmatpush.msra.mxu0 %v188
    %1278 = vmatpush.msra.mxu0 %v184
    %1279 = vmatpush.msra.mxu0 %v180
    %1280 = vmatpush.msra.mxu0 %v176
    %1281 = vmatpush.msra.mxu0 %v172
    %1282 = vmatpush.msra.mxu0 %v168
    %1283 = vmatpush.msra.mxu0 %v164
    %1284 = vmatpush.msra.mxu0 %v160
    %1285 = vmatpush.msra.mxu0 %v156
    %1286 = vmatpush.msra.mxu0 %v152
    %1287 = vmatpush.msra.mxu0 %v148
    %1288 = vmatpush.msra.mxu0 %v144
    %1289 = vmatmul.f32.gmra.mxu0 %v131
    %v1290 = vpop.f32.mrf.mxu0
    %v1291 = vadd.f32 %v810, %v1290
    %1292 = vdwg.mxu0
    %1293 = vmatpush.msra.mxu0 %v268
    %1294 = vmatpush.msra.mxu0 %v264
    %1295 = vmatpush.msra.mxu0 %v260
    %1296 = vmatpush.msra.mxu0 %v256
    %1297 = vmatpush.msra.mxu0 %v252
    %1298 = vmatpush.msra.mxu0 %v248
    %1299 = vmatpush.msra.mxu0 %v244
    %1300 = vmatpush.msra.mxu0 %v240
    %1301 = vmatpush.msra.mxu0 %v236
    %1302 = vmatpush.msra.mxu0 %v232
    %1303 = vmatpush.msra.mxu0 %v228
    %1304 = vmatpush.msra.mxu0 %v224
    %1305 = vmatpush.msra.mxu0 %v220
    %1306 = vmatpush.msra.mxu0 %v216
    %1307 = vmatpush.msra.mxu0 %v212
    %1308 = vmatpush.msra.mxu0 %v208
    %1309 = vmatmul.f32.gmra.mxu0 %v132
    %v1310 = vpop.f32.mrf.mxu0
    %v1311 = vadd.f32 %v1291, %v1310
    %1312 = vdwg.mxu0
    %1313 = vmatpush.msra.mxu0 %v332
    %1314 = vmatpush.msra.mxu0 %v328
    %1315 = vmatpush.msra.mxu0 %v324
    %1316 = vmatpush.msra.mxu0 %v320
    %1317 = vmatpush.msra.mxu0 %v316
    %1318 = vmatpush.msra.mxu0 %v312
    %1319 = vmatpush.msra.mxu0 %v308
    %1320 = vmatpush.msra.mxu0 %v304
    %1321 = vmatpush.msra.mxu0 %v300
    %1322 = vmatpush.msra.mxu0 %v296
    %1323 = vmatpush.msra.mxu0 %v292
    %1324 = vmatpush.msra.mxu0 %v288
    %1325 = vmatpush.msra.mxu0 %v284
    %1326 = vmatpush.msra.mxu0 %v280
    %1327 = vmatpush.msra.mxu0 %v276
    %1328 = vmatpush.msra.mxu0 %v272
    %1329 = vmatmul.f32.gmra.mxu0 %v133
    %v1330 = vpop.f32.mrf.mxu0
    %v1331 = vadd.f32 %v1311, %v1330
    %1332 = vdwg.mxu0
    %1333 = vmatpush.msra.mxu0 %v396
    %1334 = vmatpush.msra.mxu0 %v392
    %1335 = vmatpush.msra.mxu0 %v388
    %1336 = vmatpush.msra.mxu0 %v384
    %1337 = vmatpush.msra.mxu0 %v380
    %1338 = vmatpush.msra.mxu0 %v376
    %1339 = vmatpush.msra.mxu0 %v372
    %1340 = vmatpush.msra.mxu0 %v368
    %1341 = vmatpush.msra.mxu0 %v364
    %1342 = vmatpush.msra.mxu0 %v360
    %1343 = vmatpush.msra.mxu0 %v356
    %1344 = vmatpush.msra.mxu0 %v352
    %1345 = vmatpush.msra.mxu0 %v348
    %1346 = vmatpush.msra.mxu0 %v344
    %1347 = vmatpush.msra.mxu0 %v340
    %1348 = vmatpush.msra.mxu0 %v336
    %1349 = vmatmul.f32.gmra.mxu0 %v134
    %v1350 = vpop.f32.mrf.mxu0
    %v1351 = vadd.f32 %v1331, %v1350
    %1352 = vdwg.mxu0
    %1353 = vmatpush.msra.mxu0 %v460
    %1354 = vmatpush.msra.mxu0 %v456
    %1355 = vmatpush.msra.mxu0 %v452
    %1356 = vmatpush.msra.mxu0 %v448
    %1357 = vmatpush.msra.mxu0 %v444
    %1358 = vmatpush.msra.mxu0 %v440
    %1359 = vmatpush.msra.mxu0 %v436
    %1360 = vmatpush.msra.mxu0 %v432
    %1361 = vmatpush.msra.mxu0 %v428
    %1362 = vmatpush.msra.mxu0 %v424
    %1363 = vmatpush.msra.mxu0 %v420
    %1364 = vmatpush.msra.mxu0 %v416
    %1365 = vmatpush.msra.mxu0 %v412
    %1366 = vmatpush.msra.mxu0 %v408
    %1367 = vmatpush.msra.mxu0 %v404
    %1368 = vmatpush.msra.mxu0 %v400
    %1369 = vmatmul.f32.gmra.mxu0 %v135
    %v1370 = vpop.f32.mrf.mxu0
    %v1371 = vadd.f32 %v1351, %v1370
    %1372 = vdwg.mxu0
    %1373 = vmatpush.msra.mxu0 %v524
    %1374 = vmatpush.msra.mxu0 %v520
    %1375 = vmatpush.msra.mxu0 %v516
    %1376 = vmatpush.msra.mxu0 %v512
    %1377 = vmatpush.msra.mxu0 %v508
    %1378 = vmatpush.msra.mxu0 %v504
    %1379 = vmatpush.msra.mxu0 %v500
    %1380 = vmatpush.msra.mxu0 %v496
    %1381 = vmatpush.msra.mxu0 %v492
    %1382 = vmatpush.msra.mxu0 %v488
    %1383 = vmatpush.msra.mxu0 %v484
    %1384 = vmatpush.msra.mxu0 %v480
    %1385 = vmatpush.msra.mxu0 %v476
    %1386 = vmatpush.msra.mxu0 %v472
    %1387 = vmatpush.msra.mxu0 %v468
    %1388 = vmatpush.msra.mxu0 %v464
    %1389 = vmatmul.f32.gmra.mxu0 %v136
    %v1390 = vpop.f32.mrf.mxu0
    %v1391 = vadd.f32 %v1371, %v1390
    %1392 = vdwg.mxu0
    %1393 = vmatpush.msra.mxu0 %v588
    %1394 = vmatpush.msra.mxu0 %v584
    %1395 = vmatpush.msra.mxu0 %v580
    %1396 = vmatpush.msra.mxu0 %v576
    %1397 = vmatpush.msra.mxu0 %v572
    %1398 = vmatpush.msra.mxu0 %v568
    %1399 = vmatpush.msra.mxu0 %v564
    %1400 = vmatpush.msra.mxu0 %v560
    %1401 = vmatpush.msra.mxu0 %v556
    %1402 = vmatpush.msra.mxu0 %v552
    %1403 = vmatpush.msra.mxu0 %v548
    %1404 = vmatpush.msra.mxu0 %v544
    %1405 = vmatpush.msra.mxu0 %v540
    %1406 = vmatpush.msra.mxu0 %v536
    %1407 = vmatpush.msra.mxu0 %v532
    %1408 = vmatpush.msra.mxu0 %v528
    %1409 = vmatmul.f32.gmra.mxu0 %v137
    %v1410 = vpop.f32.mrf.mxu0
    %v1411 = vadd.f32 %v1391, %v1410
    %1412 = vdwg.mxu0
    %1413 = vmatpush.msra.mxu0 %v652
    %1414 = vmatpush.msra.mxu0 %v648
    %1415 = vmatpush.msra.mxu0 %v644
    %1416 = vmatpush.msra.mxu0 %v640
    %1417 = vmatpush.msra.mxu0 %v636
    %1418 = vmatpush.msra.mxu0 %v632
    %1419 = vmatpush.msra.mxu0 %v628
    %1420 = vmatpush.msra.mxu0 %v624
    %1421 = vmatpush.msra.mxu0 %v620
    %1422 = vmatpush.msra.mxu0 %v616
    %1423 = vmatpush.msra.mxu0 %v612
    %1424 = vmatpush.msra.mxu0 %v608
    %1425 = vmatpush.msra.mxu0 %v604
    %1426 = vmatpush.msra.mxu0 %v600
    %1427 = vmatpush.msra.mxu0 %v596
    %1428 = vmatpush.msra.mxu0 %v592
    %1429 = vmatmul.f32.gmra.mxu0 %v138
    %v1430 = vpop.f32.mrf.mxu0
    %v1431 = vadd.f32 %v1411, %v1430
    %1432 = vdwg.mxu0
    %1433 = vmatpush.msra.mxu0 %v716
    %1434 = vmatpush.msra.mxu0 %v712
    %1435 = vmatpush.msra.mxu0 %v708
    %1436 = vmatpush.msra.mxu0 %v704
    %1437 = vmatpush.msra.mxu0 %v700
    %1438 = vmatpush.msra.mxu0 %v696
    %1439 = vmatpush.msra.mxu0 %v692
    %1440 = vmatpush.msra.mxu0 %v688
    %1441 = vmatpush.msra.mxu0 %v684
    %1442 = vmatpush.msra.mxu0 %v680
    %1443 = vmatpush.msra.mxu0 %v676
    %1444 = vmatpush.msra.mxu0 %v672
    %1445 = vmatpush.msra.mxu0 %v668
    %1446 = vmatpush.msra.mxu0 %v664
    %1447 = vmatpush.msra.mxu0 %v660
    %1448 = vmatpush.msra.mxu0 %v656
    %1449 = vmatmul.f32.gmra.mxu0 %v139
    %v1450 = vpop.f32.mrf.mxu0
    %v1451 = vadd.f32 %v1431, %v1450
    %1452 = vdwg.mxu0
    %1453 = vmatpush.msra.mxu0 %v780
    %1454 = vmatpush.msra.mxu0 %v776
    %1455 = vmatpush.msra.mxu0 %v772
    %1456 = vmatpush.msra.mxu0 %v768
    %1457 = vmatpush.msra.mxu0 %v764
    %1458 = vmatpush.msra.mxu0 %v760
    %1459 = vmatpush.msra.mxu0 %v756
    %1460 = vmatpush.msra.mxu0 %v752
    %1461 = vmatpush.msra.mxu0 %v748
    %1462 = vmatpush.msra.mxu0 %v744
    %1463 = vmatpush.msra.mxu0 %v740
    %1464 = vmatpush.msra.mxu0 %v736
    %1465 = vmatpush.msra.mxu0 %v732
    %1466 = vmatpush.msra.mxu0 %v728
    %1467 = vmatpush.msra.mxu0 %v724
    %1468 = vmatpush.msra.mxu0 %v720
    %1469 = vmatmul.f32.gmra.mxu0 %v140
    %v1470 = vpop.f32.mrf.mxu0
    %v1471 = vadd.f32 %v1451, %v1470
    %1472 = vdwg.mxu0
    %1473 = vmatpush.msra.mxu0 0.0
    %1474 = vmatpush.msra.mxu0 0.0
    %1475 = vmatpush.msra.mxu0 0.0
    %1476 = vmatpush.msra.mxu0 0.0
    %1477 = vmatpush.msra.mxu0 0.0
    %1478 = vmatpush.msra.mxu0 0.0
    %1479 = vmatpush.msra.mxu0 0.0
    %1480 = vmatpush.msra.mxu0 0.0
    %1481 = vmatpush.msra.mxu0 0.0
    %1482 = vmatpush.msra.mxu0 0.0
    %1483 = vmatpush.msra.mxu0 %v828
    %1484 = vmatpush.msra.mxu0 %v800
    %1485 = vmatpush.msra.mxu0 %v796
    %1486 = vmatpush.msra.mxu0 %v792
    %1487 = vmatpush.msra.mxu0 %v788
    %1488 = vmatpush.msra.mxu0 %v784
    %1489 = vmatmul.f32.gmra.mxu0 %v818
    %v1490 = vpop.f32.mrf.mxu0
    %v1491 = vadd.f32 %v1471, %v1490
    %1492 = vdwg.mxu0
    %1493 = vmatpush.msra.mxu0 %v205
    %1494 = vmatpush.msra.mxu0 %v201
    %1495 = vmatpush.msra.mxu0 %v197
    %1496 = vmatpush.msra.mxu0 %v193
    %1497 = vmatpush.msra.mxu0 %v189
    %1498 = vmatpush.msra.mxu0 %v185
    %1499 = vmatpush.msra.mxu0 %v181
    %1500 = vmatpush.msra.mxu0 %v177
    %1501 = vmatpush.msra.mxu0 %v173
    %1502 = vmatpush.msra.mxu0 %v169
    %1503 = vmatpush.msra.mxu0 %v165
    %1504 = vmatpush.msra.mxu0 %v161
    %1505 = vmatpush.msra.mxu0 %v157
    %1506 = vmatpush.msra.mxu0 %v153
    %1507 = vmatpush.msra.mxu0 %v149
    %1508 = vmatpush.msra.mxu0 %v145
    %1509 = vmatmul.f32.gmra.mxu0 %v131
    %v1510 = vpop.f32.mrf.mxu0
    %v1511 = vadd.f32 %v811, %v1510
    %1512 = vdwg.mxu0
    %1513 = vmatpush.msra.mxu0 %v269
    %1514 = vmatpush.msra.mxu0 %v265
    %1515 = vmatpush.msra.mxu0 %v261
    %1516 = vmatpush.msra.mxu0 %v257
    %1517 = vmatpush.msra.mxu0 %v253
    %1518 = vmatpush.msra.mxu0 %v249
    %1519 = vmatpush.msra.mxu0 %v245
    %1520 = vmatpush.msra.mxu0 %v241
    %1521 = vmatpush.msra.mxu0 %v237
    %1522 = vmatpush.msra.mxu0 %v233
    %1523 = vmatpush.msra.mxu0 %v229
    %1524 = vmatpush.msra.mxu0 %v225
    %1525 = vmatpush.msra.mxu0 %v221
    %1526 = vmatpush.msra.mxu0 %v217
    %1527 = vmatpush.msra.mxu0 %v213
    %1528 = vmatpush.msra.mxu0 %v209
    %1529 = vmatmul.f32.gmra.mxu0 %v132
    %v1530 = vpop.f32.mrf.mxu0
    %v1531 = vadd.f32 %v1511, %v1530
    %1532 = vdwg.mxu0
    %1533 = vmatpush.msra.mxu0 %v333
    %1534 = vmatpush.msra.mxu0 %v329
    %1535 = vmatpush.msra.mxu0 %v325
    %1536 = vmatpush.msra.mxu0 %v321
    %1537 = vmatpush.msra.mxu0 %v317
    %1538 = vmatpush.msra.mxu0 %v313
    %1539 = vmatpush.msra.mxu0 %v309
    %1540 = vmatpush.msra.mxu0 %v305
    %1541 = vmatpush.msra.mxu0 %v301
    %1542 = vmatpush.msra.mxu0 %v297
    %1543 = vmatpush.msra.mxu0 %v293
    %1544 = vmatpush.msra.mxu0 %v289
    %1545 = vmatpush.msra.mxu0 %v285
    %1546 = vmatpush.msra.mxu0 %v281
    %1547 = vmatpush.msra.mxu0 %v277
    %1548 = vmatpush.msra.mxu0 %v273
    %1549 = vmatmul.f32.gmra.mxu0 %v133
    %v1550 = vpop.f32.mrf.mxu0
    %v1551 = vadd.f32 %v1531, %v1550
    %1552 = vdwg.mxu0
    %1553 = vmatpush.msra.mxu0 %v397
    %1554 = vmatpush.msra.mxu0 %v393
    %1555 = vmatpush.msra.mxu0 %v389
    %1556 = vmatpush.msra.mxu0 %v385
    %1557 = vmatpush.msra.mxu0 %v381
    %1558 = vmatpush.msra.mxu0 %v377
    %1559 = vmatpush.msra.mxu0 %v373
    %1560 = vmatpush.msra.mxu0 %v369
    %1561 = vmatpush.msra.mxu0 %v365
    %1562 = vmatpush.msra.mxu0 %v361
    %1563 = vmatpush.msra.mxu0 %v357
    %1564 = vmatpush.msra.mxu0 %v353
    %1565 = vmatpush.msra.mxu0 %v349
    %1566 = vmatpush.msra.mxu0 %v345
    %1567 = vmatpush.msra.mxu0 %v341
    %1568 = vmatpush.msra.mxu0 %v337
    %1569 = vmatmul.f32.gmra.mxu0 %v134
    %v1570 = vpop.f32.mrf.mxu0
    %v1571 = vadd.f32 %v1551, %v1570
    %1572 = vdwg.mxu0
    %1573 = vmatpush.msra.mxu0 %v461
    %1574 = vmatpush.msra.mxu0 %v457
    %1575 = vmatpush.msra.mxu0 %v453
    %1576 = vmatpush.msra.mxu0 %v449
    %1577 = vmatpush.msra.mxu0 %v445
    %1578 = vmatpush.msra.mxu0 %v441
    %1579 = vmatpush.msra.mxu0 %v437
    %1580 = vmatpush.msra.mxu0 %v433
    %1581 = vmatpush.msra.mxu0 %v429
    %1582 = vmatpush.msra.mxu0 %v425
    %1583 = vmatpush.msra.mxu0 %v421
    %1584 = vmatpush.msra.mxu0 %v417
    %1585 = vmatpush.msra.mxu0 %v413
    %1586 = vmatpush.msra.mxu0 %v409
    %1587 = vmatpush.msra.mxu0 %v405
    %1588 = vmatpush.msra.mxu0 %v401
    %1589 = vmatmul.f32.gmra.mxu0 %v135
    %v1590 = vpop.f32.mrf.mxu0
    %v1591 = vadd.f32 %v1571, %v1590
    %1592 = vdwg.mxu0
    %1593 = vmatpush.msra.mxu0 %v525
    %1594 = vmatpush.msra.mxu0 %v521
    %1595 = vmatpush.msra.mxu0 %v517
    %1596 = vmatpush.msra.mxu0 %v513
    %1597 = vmatpush.msra.mxu0 %v509
    %1598 = vmatpush.msra.mxu0 %v505
    %1599 = vmatpush.msra.mxu0 %v501
    %1600 = vmatpush.msra.mxu0 %v497
    %1601 = vmatpush.msra.mxu0 %v493
    %1602 = vmatpush.msra.mxu0 %v489
    %1603 = vmatpush.msra.mxu0 %v485
    %1604 = vmatpush.msra.mxu0 %v481
    %1605 = vmatpush.msra.mxu0 %v477
    %1606 = vmatpush.msra.mxu0 %v473
    %1607 = vmatpush.msra.mxu0 %v469
    %1608 = vmatpush.msra.mxu0 %v465
    %1609 = vmatmul.f32.gmra.mxu0 %v136
    %v1610 = vpop.f32.mrf.mxu0
    %v1611 = vadd.f32 %v1591, %v1610
    %1612 = vdwg.mxu0
    %1613 = vmatpush.msra.mxu0 %v589
    %1614 = vmatpush.msra.mxu0 %v585
    %1615 = vmatpush.msra.mxu0 %v581
    %1616 = vmatpush.msra.mxu0 %v577
    %1617 = vmatpush.msra.mxu0 %v573
    %1618 = vmatpush.msra.mxu0 %v569
    %1619 = vmatpush.msra.mxu0 %v565
    %1620 = vmatpush.msra.mxu0 %v561
    %1621 = vmatpush.msra.mxu0 %v557
    %1622 = vmatpush.msra.mxu0 %v553
    %1623 = vmatpush.msra.mxu0 %v549
    %1624 = vmatpush.msra.mxu0 %v545
    %1625 = vmatpush.msra.mxu0 %v541
    %1626 = vmatpush.msra.mxu0 %v537
    %1627 = vmatpush.msra.mxu0 %v533
    %1628 = vmatpush.msra.mxu0 %v529
    %1629 = vmatmul.f32.gmra.mxu0 %v137
    %v1630 = vpop.f32.mrf.mxu0
    %v1631 = vadd.f32 %v1611, %v1630
    %1632 = vdwg.mxu0
    %1633 = vmatpush.msra.mxu0 %v653
    %1634 = vmatpush.msra.mxu0 %v649
    %1635 = vmatpush.msra.mxu0 %v645
    %1636 = vmatpush.msra.mxu0 %v641
    %1637 = vmatpush.msra.mxu0 %v637
    %1638 = vmatpush.msra.mxu0 %v633
    %1639 = vmatpush.msra.mxu0 %v629
    %1640 = vmatpush.msra.mxu0 %v625
    %1641 = vmatpush.msra.mxu0 %v621
    %1642 = vmatpush.msra.mxu0 %v617
    %1643 = vmatpush.msra.mxu0 %v613
    %1644 = vmatpush.msra.mxu0 %v609
    %1645 = vmatpush.msra.mxu0 %v605
    %1646 = vmatpush.msra.mxu0 %v601
    %1647 = vmatpush.msra.mxu0 %v597
    %1648 = vmatpush.msra.mxu0 %v593
    %1649 = vmatmul.f32.gmra.mxu0 %v138
    %v1650 = vpop.f32.mrf.mxu0
    %v1651 = vadd.f32 %v1631, %v1650
    %1652 = vdwg.mxu0
    %1653 = vmatpush.msra.mxu0 %v717
    %1654 = vmatpush.msra.mxu0 %v713
    %1655 = vmatpush.msra.mxu0 %v709
    %1656 = vmatpush.msra.mxu0 %v705
    %1657 = vmatpush.msra.mxu0 %v701
    %1658 = vmatpush.msra.mxu0 %v697
    %1659 = vmatpush.msra.mxu0 %v693
    %1660 = vmatpush.msra.mxu0 %v689
    %1661 = vmatpush.msra.mxu0 %v685
    %1662 = vmatpush.msra.mxu0 %v681
    %1663 = vmatpush.msra.mxu0 %v677
    %1664 = vmatpush.msra.mxu0 %v673
    %1665 = vmatpush.msra.mxu0 %v669
    %1666 = vmatpush.msra.mxu0 %v665
    %1667 = vmatpush.msra.mxu0 %v661
    %1668 = vmatpush.msra.mxu0 %v657
    %1669 = vmatmul.f32.gmra.mxu0 %v139
    %v1670 = vpop.f32.mrf.mxu0
    %v1671 = vadd.f32 %v1651, %v1670
    %1672 = vdwg.mxu0
    %1673 = vmatpush.msra.mxu0 %v781
    %1674 = vmatpush.msra.mxu0 %v777
    %1675 = vmatpush.msra.mxu0 %v773
    %1676 = vmatpush.msra.mxu0 %v769
    %1677 = vmatpush.msra.mxu0 %v765
    %1678 = vmatpush.msra.mxu0 %v761
    %1679 = vmatpush.msra.mxu0 %v757
    %1680 = vmatpush.msra.mxu0 %v753
    %1681 = vmatpush.msra.mxu0 %v749
    %1682 = vmatpush.msra.mxu0 %v745
    %1683 = vmatpush.msra.mxu0 %v741
    %1684 = vmatpush.msra.mxu0 %v737
    %1685 = vmatpush.msra.mxu0 %v733
    %1686 = vmatpush.msra.mxu0 %v729
    %1687 = vmatpush.msra.mxu0 %v725
    %1688 = vmatpush.msra.mxu0 %v721
    %1689 = vmatmul.f32.gmra.mxu0 %v140
    %v1690 = vpop.f32.mrf.mxu0
    %v1691 = vadd.f32 %v1671, %v1690
    %1692 = vdwg.mxu0
    %1693 = vmatpush.msra.mxu0 0.0
    %1694 = vmatpush.msra.mxu0 0.0
    %1695 = vmatpush.msra.mxu0 0.0
    %1696 = vmatpush.msra.mxu0 0.0
    %1697 = vmatpush.msra.mxu0 0.0
    %1698 = vmatpush.msra.mxu0 0.0
    %1699 = vmatpush.msra.mxu0 0.0
    %1700 = vmatpush.msra.mxu0 0.0
    %1701 = vmatpush.msra.mxu0 0.0
    %1702 = vmatpush.msra.mxu0 0.0
    %1703 = vmatpush.msra.mxu0 %v831
    %1704 = vmatpush.msra.mxu0 %v801
    %1705 = vmatpush.msra.mxu0 %v797
    %1706 = vmatpush.msra.mxu0 %v793
    %1707 = vmatpush.msra.mxu0 %v789
    %1708 = vmatpush.msra.mxu0 %v785
    %1709 = vmatmul.f32.gmra.mxu0 %v818
    %v1710 = vpop.f32.mrf.mxu0
    %v1711 = vadd.f32 %v1691, %v1710
    %1712 = vdwg.mxu0
    %v1713 = vmax.f32 %v1051, 0.0
    %v1714 = vmax.f32 %v1271, 0.0
    %v1715 = vmax.f32 %v1491, 0.0
    %v1716 = vmax.f32 %v1711, 0.0
    %v1717 = vld [vmem:[#allocation10] sm:$0xff]
    %v1718 = vld [vmem:[#allocation10 + $0x8] sm:$0xff]
    %v1719 = vld [vmem:[#allocation10 + $0x10] sm:$0xff]
    %v1720 = vld [vmem:[#allocation10 + $0x18] sm:$0xff]
    %v1721 = vld [vmem:[#allocation10 + $0x20] sm:$0xff]
    %v1722 = vld [vmem:[#allocation10 + $0x28] sm:$0xff]
    %v1723 = vld [vmem:[#allocation10 + $0x30] sm:$0xff]
    %v1724 = vld [vmem:[#allocation10 + $0x38] sm:$0xff]
    %v1725 = vld [vmem:[#allocation10 + $0x40] sm:$0xff]
    %v1726 = vld [vmem:[#allocation10 + $0x48] sm:$0xff]
    %v1727 = vld [vmem:[#allocation10 + $0x50] sm:$0xff]
    %v1728 = vld [vmem:[#allocation10 + $0x58] sm:$0xff]
    %v1729 = vld [vmem:[#allocation10 + $0x60] sm:$0xff]
    %v1730 = vld [vmem:[#allocation10 + $0x68] sm:$0xff]
    %v1731 = vld [vmem:[#allocation10 + $0x70] sm:$0xff]
    %v1732 = vld [vmem:[#allocation10 + $0x78] sm:$0xff]
    %v1733 = vld [vmem:[#allocation10 + $0x80] sm:$0xff]
    %v1734 = vld [vmem:[#allocation10 + $0x88] sm:$0xff]
    %v1735 = vld [vmem:[#allocation10 + $0x90] sm:$0xff]
    %v1736 = vld [vmem:[#allocation10 + $0x98] sm:$0xff]
    %v1737 = vld [vmem:[#allocation10 + $0xa0] sm:$0xff]
    %v1738 = vld [vmem:[#allocation10 + $0xa8] sm:$0xff]
    %v1739 = vld [vmem:[#allocation10 + $0xb0] sm:$0xff]
    %v1740 = vld [vmem:[#allocation10 + $0xb8] sm:$0xff]
    %v1741 = vld [vmem:[#allocation10 + $0xc0] sm:$0xff]
    %v1742 = vld [vmem:[#allocation10 + $0xc8] sm:$0xff]
    %v1743 = vld [vmem:[#allocation10 + $0xd0] sm:$0xff]
    %v1744 = vld [vmem:[#allocation10 + $0xd8] sm:$0xff]
    %v1745 = vld [vmem:[#allocation10 + $0xe0] sm:$0xff]
    %v1746 = vld [vmem:[#allocation10 + $0xe8] sm:$0xff]
    %v1747 = vld [vmem:[#allocation10 + $0xf0] sm:$0xff]
    %v1748 = vld [vmem:[#allocation10 + $0xf8] sm:$0xff]
    %v1749 = vld [vmem:[#allocation10 + $0x100] sm:$0xff]
    %v1750 = vld [vmem:[#allocation10 + $0x108] sm:$0xff]
    %v1751 = vld [vmem:[#allocation10 + $0x110] sm:$0xff]
    %v1752 = vld [vmem:[#allocation10 + $0x118] sm:$0xff]
    %v1753 = vld [vmem:[#allocation10 + $0x120] sm:$0xff]
    %v1754 = vld [vmem:[#allocation10 + $0x128] sm:$0xff]
    %v1755 = vld [vmem:[#allocation10 + $0x130] sm:$0xff]
    %v1756 = vld [vmem:[#allocation10 + $0x138] sm:$0xff]
    %v1757 = vld [vmem:[#allocation10 + $0x140] sm:$0xff]
    %v1758 = vld [vmem:[#allocation10 + $0x148] sm:$0xff]
    %v1759 = vld [vmem:[#allocation10 + $0x150] sm:$0xff]
    %v1760 = vld [vmem:[#allocation10 + $0x158] sm:$0xff]
    %v1761 = vld [vmem:[#allocation10 + $0x160] sm:$0xff]
    %v1762 = vld [vmem:[#allocation10 + $0x168] sm:$0xff]
    %v1763 = vld [vmem:[#allocation10 + $0x170] sm:$0xff]
    %v1764 = vld [vmem:[#allocation10 + $0x178] sm:$0xff]
    %v1765 = vld [vmem:[#allocation10 + $0x180] sm:$0xff]
    %v1766 = vld [vmem:[#allocation10 + $0x188] sm:$0xff]
    %v1767 = vld [vmem:[#allocation10 + $0x190] sm:$0xff]
    %v1768 = vld [vmem:[#allocation10 + $0x198] sm:$0xff]
    %v1769 = vld [vmem:[#allocation10 + $0x1a0] sm:$0xff]
    %v1770 = vld [vmem:[#allocation10 + $0x1a8] sm:$0xff]
    %v1771 = vld [vmem:[#allocation10 + $0x1b0] sm:$0xff]
    %v1772 = vld [vmem:[#allocation10 + $0x1b8] sm:$0xff]
    %v1773 = vld [vmem:[#allocation10 + $0x1c0] sm:$0xff]
    %v1774 = vld [vmem:[#allocation10 + $0x1c8] sm:$0xff]
    %v1775 = vld [vmem:[#allocation10 + $0x1d0] sm:$0xff]
    %v1776 = vld [vmem:[#allocation10 + $0x1d8] sm:$0xff]
    %v1777 = vld [vmem:[#allocation10 + $0x1e0] sm:$0xff]
    %v1778 = vld [vmem:[#allocation10 + $0x1e8] sm:$0xff]
    %v1779 = vld [vmem:[#allocation10 + $0x1f0] sm:$0xff]
    %v1780 = vld [vmem:[#allocation10 + $0x1f8] sm:$0xff]
    %v1781 = vld [vmem:[#allocation10 + $0x200] sm:$0xff]
    %v1782 = vld [vmem:[#allocation10 + $0x208] sm:$0xff]
    %v1783 = vld [vmem:[#allocation10 + $0x210] sm:$0xff]
    %v1784 = vld [vmem:[#allocation10 + $0x218] sm:$0xff]
    %v1785 = vld [vmem:[#allocation10 + $0x220] sm:$0xff]
    %v1786 = vld [vmem:[#allocation10 + $0x228] sm:$0xff]
    %v1787 = vld [vmem:[#allocation10 + $0x230] sm:$0xff]
    %v1788 = vld [vmem:[#allocation10 + $0x238] sm:$0xff]
    %v1789 = vld [vmem:[#allocation10 + $0x240] sm:$0xff]
    %v1790 = vld [vmem:[#allocation10 + $0x248] sm:$0xff]
    %v1791 = vld [vmem:[#allocation10 + $0x250] sm:$0xff]
    %v1792 = vld [vmem:[#allocation10 + $0x258] sm:$0xff]
    %v1793 = vld [vmem:[#allocation10 + $0x260] sm:$0xff]
    %v1794 = vld [vmem:[#allocation10 + $0x268] sm:$0xff]
    %v1795 = vld [vmem:[#allocation10 + $0x270] sm:$0xff]
    %v1796 = vld [vmem:[#allocation10 + $0x278] sm:$0xff]
    %v1797 = vld [vmem:[#allocation10 + $0x280] sm:$0xff]
    %v1798 = vld [vmem:[#allocation10 + $0x288] sm:$0xff]
    %v1799 = vld [vmem:[#allocation10 + $0x290] sm:$0xff]
    %v1800 = vld [vmem:[#allocation10 + $0x298] sm:$0xff]
    %v1801 = vld [vmem:[#allocation10 + $0x2a0] sm:$0xff]
    %v1802 = vld [vmem:[#allocation10 + $0x2a8] sm:$0xff]
    %v1803 = vld [vmem:[#allocation10 + $0x2b0] sm:$0xff]
    %v1804 = vld [vmem:[#allocation10 + $0x2b8] sm:$0xff]
    %v1805 = vld [vmem:[#allocation10 + $0x2c0] sm:$0xff]
    %v1806 = vld [vmem:[#allocation10 + $0x2c8] sm:$0xff]
    %v1807 = vld [vmem:[#allocation10 + $0x2d0] sm:$0xff]
    %v1808 = vld [vmem:[#allocation10 + $0x2d8] sm:$0xff]
    %v1809 = vld [vmem:[#allocation10 + $0x2e0] sm:$0xff]
    %v1810 = vld [vmem:[#allocation10 + $0x2e8] sm:$0xff]
    %v1811 = vld [vmem:[#allocation10 + $0x2f0] sm:$0xff]
    %v1812 = vld [vmem:[#allocation10 + $0x2f8] sm:$0xff]
    %v1813 = vld [vmem:[#allocation10 + $0x300] sm:$0xff]
    %v1814 = vld [vmem:[#allocation10 + $0x308] sm:$0xff]
    %v1815 = vld [vmem:[#allocation10 + $0x310] sm:$0xff]
    %v1816 = vld [vmem:[#allocation10 + $0x318] sm:$0xff]
    %v1817 = vld [vmem:[#allocation10 + $0x320] sm:$0xff]
    %v1818 = vld [vmem:[#allocation10 + $0x328] sm:$0xff]
    %v1819 = vld [vmem:[#allocation10 + $0x330] sm:$0xff]
    %v1820 = vld [vmem:[#allocation10 + $0x338] sm:$0xff]
    %v1821 = vld [vmem:[#allocation10 + $0x340] sm:$0xff]
    %v1822 = vld [vmem:[#allocation10 + $0x348] sm:$0xff]
    %v1823 = vld [vmem:[#allocation10 + $0x350] sm:$0xff]
    %v1824 = vld [vmem:[#allocation10 + $0x358] sm:$0xff]
    %v1825 = vld [vmem:[#allocation10 + $0x360] sm:$0xff]
    %v1826 = vld [vmem:[#allocation10 + $0x368] sm:$0xff]
    %v1827 = vld [vmem:[#allocation10 + $0x370] sm:$0xff]
    %v1828 = vld [vmem:[#allocation10 + $0x378] sm:$0xff]
    %v1829 = vld [vmem:[#allocation10 + $0x380] sm:$0xff]
    %v1830 = vld [vmem:[#allocation10 + $0x388] sm:$0xff]
    %v1831 = vld [vmem:[#allocation10 + $0x390] sm:$0xff]
    %v1832 = vld [vmem:[#allocation10 + $0x398] sm:$0xff]
    %v1833 = vld [vmem:[#allocation10 + $0x3a0] sm:$0xff]
    %v1834 = vld [vmem:[#allocation10 + $0x3a8] sm:$0xff]
    %v1835 = vld [vmem:[#allocation10 + $0x3b0] sm:$0xff]
    %v1836 = vld [vmem:[#allocation10 + $0x3b8] sm:$0xff]
    %v1837 = vld [vmem:[#allocation10 + $0x3c0] sm:$0xff]
    %v1838 = vld [vmem:[#allocation10 + $0x3c8] sm:$0xff]
    %v1839 = vld [vmem:[#allocation10 + $0x3d0] sm:$0xff]
    %v1840 = vld [vmem:[#allocation10 + $0x3d8] sm:$0xff]
    %v1841 = vld [vmem:[#allocation10 + $0x3e0] sm:$0xff]
    %v1842 = vld [vmem:[#allocation10 + $0x3e8] sm:$0xff]
    %v1843 = vld [vmem:[#allocation10 + $0x3f0] sm:$0xff]
    %v1844 = vld [vmem:[#allocation10 + $0x3f8] sm:$0xff]
    %v1845 = vld [vmem:[#allocation12] sm:$0x3]
    %v1847 = vperm.slane %v1845, 0
    %v1848 = vperm.slane %v1845, 1
    %1851 = vmatpush.msra.mxu0 %v1747
    %1852 = vmatpush.msra.mxu0 %v1745
    %1853 = vmatpush.msra.mxu0 %v1743
    %1854 = vmatpush.msra.mxu0 %v1741
    %1855 = vmatpush.msra.mxu0 %v1739
    %1856 = vmatpush.msra.mxu0 %v1737
    %1857 = vmatpush.msra.mxu0 %v1735
    %1858 = vmatpush.msra.mxu0 %v1733
    %1859 = vmatpush.msra.mxu0 %v1731
    %1860 = vmatpush.msra.mxu0 %v1729
    %1861 = vmatpush.msra.mxu0 %v1727
    %1862 = vmatpush.msra.mxu0 %v1725
    %1863 = vmatpush.msra.mxu0 %v1723
    %1864 = vmatpush.msra.mxu0 %v1721
    %1865 = vmatpush.msra.mxu0 %v1719
    %1866 = vmatpush.msra.mxu0 %v1717
    %1867 = vmatmul.f32.gmra.mxu0 %v1713
    %v1868 = vpop.f32.mrf.mxu0
    %v1869 = vadd.f32 %v1847, %v1868
    %1870 = vdwg.mxu0
    %1871 = vmatpush.msra.mxu0 %v1779
    %1872 = vmatpush.msra.mxu0 %v1777
    %1873 = vmatpush.msra.mxu0 %v1775
    %1874 = vmatpush.msra.mxu0 %v1773
    %1875 = vmatpush.msra.mxu0 %v1771
    %1876 = vmatpush.msra.mxu0 %v1769
    %1877 = vmatpush.msra.mxu0 %v1767
    %1878 = vmatpush.msra.mxu0 %v1765
    %1879 = vmatpush.msra.mxu0 %v1763
    %1880 = vmatpush.msra.mxu0 %v1761
    %1881 = vmatpush.msra.mxu0 %v1759
    %1882 = vmatpush.msra.mxu0 %v1757
    %1883 = vmatpush.msra.mxu0 %v1755
    %1884 = vmatpush.msra.mxu0 %v1753
    %1885 = vmatpush.msra.mxu0 %v1751
    %1886 = vmatpush.msra.mxu0 %v1749
    %1887 = vmatmul.f32.gmra.mxu0 %v1714
    %v1888 = vpop.f32.mrf.mxu0
    %v1889 = vadd.f32 %v1869, %v1888
    %1890 = vdwg.mxu0
    %1891 = vmatpush.msra.mxu0 %v1811
    %1892 = vmatpush.msra.mxu0 %v1809
    %1893 = vmatpush.msra.mxu0 %v1807
    %1894 = vmatpush.msra.mxu0 %v1805
    %1895 = vmatpush.msra.mxu0 %v1803
    %1896 = vmatpush.msra.mxu0 %v1801
    %1897 = vmatpush.msra.mxu0 %v1799
    %1898 = vmatpush.msra.mxu0 %v1797
    %1899 = vmatpush.msra.mxu0 %v1795
    %1900 = vmatpush.msra.mxu0 %v1793
    %1901 = vmatpush.msra.mxu0 %v1791
    %1902 = vmatpush.msra.mxu0 %v1789
    %1903 = vmatpush.msra.mxu0 %v1787
    %1904 = vmatpush.msra.mxu0 %v1785
    %1905 = vmatpush.msra.mxu0 %v1783
    %1906 = vmatpush.msra.mxu0 %v1781
    %1907 = vmatmul.f32.gmra.mxu0 %v1715
    %v1908 = vpop.f32.mrf.mxu0
    %v1909 = vadd.f32 %v1889, %v1908
    %1910 = vdwg.mxu0
    %1911 = vmatpush.msra.mxu0 %v1843
    %1912 = vmatpush.msra.mxu0 %v1841
    %1913 = vmatpush.msra.mxu0 %v1839
    %1914 = vmatpush.msra.mxu0 %v1837
    %1915 = vmatpush.msra.mxu0 %v1835
    %1916 = vmatpush.msra.mxu0 %v1833
    %1917 = vmatpush.msra.mxu0 %v1831
    %1918 = vmatpush.msra.mxu0 %v1829
    %1919 = vmatpush.msra.mxu0 %v1827
    %1920 = vmatpush.msra.mxu0 %v1825
    %1921 = vmatpush.msra.mxu0 %v1823
    %1922 = vmatpush.msra.mxu0 %v1821
    %1923 = vmatpush.msra.mxu0 %v1819
    %1924 = vmatpush.msra.mxu0 %v1817
    %1925 = vmatpush.msra.mxu0 %v1815
    %1926 = vmatpush.msra.mxu0 %v1813
    %1927 = vmatmul.f32.gmra.mxu0 %v1716
    %v1928 = vpop.f32.mrf.mxu0
    %v1929 = vadd.f32 %v1909, %v1928
    %1930 = vdwg.mxu0
    %1931 = vmatpush.msra.mxu0 %v1748
    %1932 = vmatpush.msra.mxu0 %v1746
    %1933 = vmatpush.msra.mxu0 %v1744
    %1934 = vmatpush.msra.mxu0 %v1742
    %1935 = vmatpush.msra.mxu0 %v1740
    %1936 = vmatpush.msra.mxu0 %v1738
    %1937 = vmatpush.msra.mxu0 %v1736
    %1938 = vmatpush.msra.mxu0 %v1734
    %1939 = vmatpush.msra.mxu0 %v1732
    %1940 = vmatpush.msra.mxu0 %v1730
    %1941 = vmatpush.msra.mxu0 %v1728
    %1942 = vmatpush.msra.mxu0 %v1726
    %1943 = vmatpush.msra.mxu0 %v1724
    %1944 = vmatpush.msra.mxu0 %v1722
    %1945 = vmatpush.msra.mxu0 %v1720
    %1946 = vmatpush.msra.mxu0 %v1718
    %1947 = vmatmul.f32.gmra.mxu0 %v1713
    %v1948 = vpop.f32.mrf.mxu0
    %v1949 = vadd.f32 %v1848, %v1948
    %1950 = vdwg.mxu0
    %1951 = vmatpush.msra.mxu0 %v1780
    %1952 = vmatpush.msra.mxu0 %v1778
    %1953 = vmatpush.msra.mxu0 %v1776
    %1954 = vmatpush.msra.mxu0 %v1774
    %1955 = vmatpush.msra.mxu0 %v1772
    %1956 = vmatpush.msra.mxu0 %v1770
    %1957 = vmatpush.msra.mxu0 %v1768
    %1958 = vmatpush.msra.mxu0 %v1766
    %1959 = vmatpush.msra.mxu0 %v1764
    %1960 = vmatpush.msra.mxu0 %v1762
    %1961 = vmatpush.msra.mxu0 %v1760
    %1962 = vmatpush.msra.mxu0 %v1758
    %1963 = vmatpush.msra.mxu0 %v1756
    %1964 = vmatpush.msra.mxu0 %v1754
    %1965 = vmatpush.msra.mxu0 %v1752
    %1966 = vmatpush.msra.mxu0 %v1750
    %1967 = vmatmul.f32.gmra.mxu0 %v1714
    %v1968 = vpop.f32.mrf.mxu0
    %v1969 = vadd.f32 %v1949, %v1968
    %1970 = vdwg.mxu0
    %1971 = vmatpush.msra.mxu0 %v1812
    %1972 = vmatpush.msra.mxu0 %v1810
    %1973 = vmatpush.msra.mxu0 %v1808
    %1974 = vmatpush.msra.mxu0 %v1806
    %1975 = vmatpush.msra.mxu0 %v1804
    %1976 = vmatpush.msra.mxu0 %v1802
    %1977 = vmatpush.msra.mxu0 %v1800
    %1978 = vmatpush.msra.mxu0 %v1798
    %1979 = vmatpush.msra.mxu0 %v1796
    %1980 = vmatpush.msra.mxu0 %v1794
    %1981 = vmatpush.msra.mxu0 %v1792
    %1982 = vmatpush.msra.mxu0 %v1790
    %1983 = vmatpush.msra.mxu0 %v1788
    %1984 = vmatpush.msra.mxu0 %v1786
    %1985 = vmatpush.msra.mxu0 %v1784
    %1986 = vmatpush.msra.mxu0 %v1782
    %1987 = vmatmul.f32.gmra.mxu0 %v1715
    %v1988 = vpop.f32.mrf.mxu0
    %v1989 = vadd.f32 %v1969, %v1988
    %1990 = vdwg.mxu0
    %1991 = vmatpush.msra.mxu0 %v1844
    %1992 = vmatpush.msra.mxu0 %v1842
    %1993 = vmatpush.msra.mxu0 %v1840
    %1994 = vmatpush.msra.mxu0 %v1838
    %1995 = vmatpush.msra.mxu0 %v1836
    %1996 = vmatpush.msra.mxu0 %v1834
    %1997 = vmatpush.msra.mxu0 %v1832
    %1998 = vmatpush.msra.mxu0 %v1830
    %1999 = vmatpush.msra.mxu0 %v1828
    %2000 = vmatpush.msra.mxu0 %v1826
    %2001 = vmatpush.msra.mxu0 %v1824
    %2002 = vmatpush.msra.mxu0 %v1822
    %2003 = vmatpush.msra.mxu0 %v1820
    %2004 = vmatpush.msra.mxu0 %v1818
    %2005 = vmatpush.msra.mxu0 %v1816
    %2006 = vmatpush.msra.mxu0 %v1814
    %2007 = vmatmul.f32.gmra.mxu0 %v1716
    %v2008 = vpop.f32.mrf.mxu0
    %v2009 = vadd.f32 %v1989, %v2008
    %2010 = vdwg.mxu0
    %v2011 = vmax.f32 %v1929, 0.0
    %v2012 = vmax.f32 %v2009, 0.0
    %v2013 = vld [vmem:[#allocation13] sm:$0xff]
    %v2014 = vld [vmem:[#allocation13 + $0x8] sm:$0xff]
    %v2015 = vld [vmem:[#allocation13 + $0x10] sm:$0xff]
    %v2016 = vld [vmem:[#allocation13 + $0x18] sm:$0xff]
    %v2017 = vld [vmem:[#allocation13 + $0x20] sm:$0xff]
    %v2018 = vld [vmem:[#allocation13 + $0x28] sm:$0xff]
    %v2019 = vld [vmem:[#allocation13 + $0x30] sm:$0xff]
    %v2020 = vld [vmem:[#allocation13 + $0x38] sm:$0xff]
    %v2021 = vld [vmem:[#allocation13 + $0x40] sm:$0xff]
    %v2022 = vld [vmem:[#allocation13 + $0x48] sm:$0xff]
    %v2023 = vld [vmem:[#allocation13 + $0x50] sm:$0xff]
    %v2024 = vld [vmem:[#allocation13 + $0x58] sm:$0xff]
    %v2025 = vld [vmem:[#allocation13 + $0x60] sm:$0xff]
    %v2026 = vld [vmem:[#allocation13 + $0x68] sm:$0xff]
    %v2027 = vld [vmem:[#allocation13 + $0x70] sm:$0xff]
    %v2028 = vld [vmem:[#allocation13 + $0x78] sm:$0xff]
    %v2029 = vld [vmem:[#allocation13 + $0x80] sm:$0xff]
    %v2030 = vld [vmem:[#allocation13 + $0x88] sm:$0xff]
    %v2031 = vld [vmem:[#allocation13 + $0x90] sm:$0xff]
    %v2032 = vld [vmem:[#allocation13 + $0x98] sm:$0xff]
    %v2033 = vld [vmem:[#allocation13 + $0xa0] sm:$0xff]
    %v2034 = vld [vmem:[#allocation13 + $0xa8] sm:$0xff]
    %v2035 = vld [vmem:[#allocation13 + $0xb0] sm:$0xff]
    %v2036 = vld [vmem:[#allocation13 + $0xb8] sm:$0xff]
    %v2037 = vld [vmem:[#allocation13 + $0xc0] sm:$0xff]
    %v2038 = vld [vmem:[#allocation13 + $0xc8] sm:$0xff]
    %v2039 = vld [vmem:[#allocation13 + $0xd0] sm:$0xff]
    %v2040 = vld [vmem:[#allocation13 + $0xd8] sm:$0xff]
    %v2041 = vld [vmem:[#allocation13 + $0xe0] sm:$0xff]
    %v2042 = vld [vmem:[#allocation13 + $0xe8] sm:$0xff]
    %v2043 = vld [vmem:[#allocation13 + $0xf0] sm:$0xff]
    %v2044 = vld [vmem:[#allocation13 + $0xf8] sm:$0xff]
    %v2045 = vld [vmem:[#allocation15] sm:$0x1]
    %v2047 = vperm.slane %v2045, 0
    %2049 = vmatpush.msra.mxu0 %v2028
    %2050 = vmatpush.msra.mxu0 %v2027
    %2051 = vmatpush.msra.mxu0 %v2026
    %2052 = vmatpush.msra.mxu0 %v2025
    %2053 = vmatpush.msra.mxu0 %v2024
    %2054 = vmatpush.msra.mxu0 %v2023
    %2055 = vmatpush.msra.mxu0 %v2022
    %2056 = vmatpush.msra.mxu0 %v2021
    %2057 = vmatpush.msra.mxu0 %v2020
    %2058 = vmatpush.msra.mxu0 %v2019
    %2059 = vmatpush.msra.mxu0 %v2018
    %2060 = vmatpush.msra.mxu0 %v2017
    %2061 = vmatpush.msra.mxu0 %v2016
    %2062 = vmatpush.msra.mxu0 %v2015
    %2063 = vmatpush.msra.mxu0 %v2014
    %2064 = vmatpush.msra.mxu0 %v2013
    %2065 = vmatmul.f32.gmra.mxu0 %v2011
    %v2066 = vpop.f32.mrf.mxu0
    %v2067 = vadd.f32 %v2047, %v2066
    %2068 = vdwg.mxu0
    %2069 = vmatpush.msra.mxu0 %v2044
    %2070 = vmatpush.msra.mxu0 %v2043
    %2071 = vmatpush.msra.mxu0 %v2042
    %2072 = vmatpush.msra.mxu0 %v2041
    %2073 = vmatpush.msra.mxu0 %v2040
    %2074 = vmatpush.msra.mxu0 %v2039
    %2075 = vmatpush.msra.mxu0 %v2038
    %2076 = vmatpush.msra.mxu0 %v2037
    %2077 = vmatpush.msra.mxu0 %v2036
    %2078 = vmatpush.msra.mxu0 %v2035
    %2079 = vmatpush.msra.mxu0 %v2034
    %2080 = vmatpush.msra.mxu0 %v2033
    %2081 = vmatpush.msra.mxu0 %v2032
    %2082 = vmatpush.msra.mxu0 %v2031
    %2083 = vmatpush.msra.mxu0 %v2030
    %2084 = vmatpush.msra.mxu0 %v2029
    %2085 = vmatmul.f32.gmra.mxu0 %v2012
    %v2086 = vpop.f32.mrf.mxu0
    %v2087 = vadd.f32 %v2067, %v2086
    %2088 = vdwg.mxu0
    %v2089 = vtanh.pop %v2087
    %v2090 = vstv %s130
    %v2091 = vmul.f32 %v2090, %v2089
    %2092 = vst [vmem:[#allocation16] sm:$0xff] %v2091
    // Predicated region
    $region58: #{tpu_custom_call.1} parent=1 // pred_check
      _
    $region59: #{tpu_custom_call.1} parent=1 // pred_check_branch
      %2094 = sbr.rel (0) target = $region61
    $region60: #{tpu_custom_call.1} parent=1 // pred_region
      %2096 = vsyncadd [#allocation6], 0
      %s2098 = sshll.u32 [#allocation16], 4
      %s2099 = int_to_ptr.vmem [resolvable:$true] %s2098
      %s2100 = sshll.u32 %s8, 4
      %s2101 = int_to_ptr.hbm [resolvable:$true] %s2100
      %2103 = dma.vmem_to_hbm [thread:$0]  %s2099, 128, %s2101, [#allocation6]
    $region61: #{tpu_custom_call.1} parent=1 // pred_fallthru
      _
    // Predicated region
    $region62: #{tpu_custom_call.1} parent=1 // pred_check
      _
    $region63: #{tpu_custom_call.1} parent=1 // pred_check_branch
      %2105 = sbr.rel (0) target = $region65
    $region64: #{tpu_custom_call.1} parent=1 // pred_region
      %2107 = dma.done [#allocation6], 128
    $region65: #{tpu_custom_call.1} parent=1 // pred_fallthru
      _
    %2108 = vsyncpa [#allocation5], 1
    %2109 = vsyncpa [#allocation8], 1
    %2110 = vsyncpa [#allocation11], 1
    %2111 = vsyncpa [#allocation14], 1
    %2112 = vsyncpa [#allocation6], 1

</llo_original>
